<compile_context>
chip_gen: v7x
topology: tpu7x:2x2x1
jax: 0.10.0
libtpu: 0.0.40
codegen_flags: <defaults>
</compile_context>

<pallas_src>
import jax
import jax.numpy as jnp
from jax.experimental import pallas as pl
from jax.experimental.pallas import tpu as pltpu


def _proj_kernel(x_ref, w_ref, o_ref):
    # x_ref: (C_in, TS) VMEM tile (channels on sublanes, spatial on lanes)
    # w_ref: (C_out, C_in) VMEM, constant block index -> resident across steps
    # o_ref: (C_out, TS) VMEM tile (lane-dense output)
    w = w_ref[...].astype(jnp.float32)          # (C_out, C_in), tiny
    x = x_ref[...].astype(jnp.float32)          # (C_in, TS)
    c_in = x.shape[0]

    # Unrolled VPU contraction: out = sum_ci w[:, ci] (x) x[ci, :]
    # (C_out,1) lane-broadcast  *  (1,TS) sublane-broadcast  ->  (C_out, TS)
    acc = w[:, 0:1] * x[0:1, :]
    for ci in range(1, c_in):
        acc = acc + w[:, ci:ci + 1] * x[ci:ci + 1, :]

    o_ref[...] = acc.astype(o_ref.dtype)


def _pick_spatial_tile(S, c_in, c_out, itemsize, budget_bytes=4 * 1024 * 1024):
    """Spatial (lane) tile: as large as fits a VMEM budget, multiple of 128."""
    per_lane = (c_in + c_out) * itemsize        # bytes per spatial position/step
    ts = max(128, (budget_bytes // per_lane) // 128 * 128)
    if S <= ts:
        return S                                # full extent: always a legal block dim
    return ts


def deep_supervision(x_ncdhw, weight_oc_ic):
    """1x1x1 Conv3d, no bias (DeepSupervision.forward).

    x_ncdhw:      (N, C_in, D, H, W)
    weight_oc_ic: (C_out, C_in)  -- squeezed PyTorch Conv3d weight (C_out, C_in, 1, 1, 1)
    returns:      (N, C_out, D, H, W)
    """
    N, C_in, D, H, W = x_ncdhw.shape
    C_out = weight_oc_ic.shape[0]
    S = D * H * W

    # Free reshape (NCDHW is contiguous); no transposes anywhere.
    x3 = x_ncdhw.reshape(N, C_in, S)

    itemsize = jnp.dtype(x_ncdhw.dtype).itemsize
    ts = _pick_spatial_tile(S, C_in, C_out, itemsize)
    n_s = pl.cdiv(S, ts)

    out3 = pl.pallas_call(
        _proj_kernel,
        out_shape=jax.ShapeDtypeStruct((N, C_out, S), x_ncdhw.dtype),
        grid_spec=pltpu.PrefetchScalarGridSpec(
            num_scalar_prefetch=0,
            grid=(N, n_s),
            in_specs=[
                # batch dim squeezed out of the kernel view
                pl.BlockSpec((None, C_in, ts), lambda n, s: (n, 0, s)),
                # weight: constant block index -> fetched once, stays resident
                pl.BlockSpec((C_out, C_in), lambda n, s: (0, 0)),
            ],
            out_specs=pl.BlockSpec((None, C_out, ts), lambda n, s: (n, 0, s)),
        ),
        compiler_params=pltpu.CompilerParams(
            # Both axes independent: lets v7x shard the grid across its 2 TCs.
            dimension_semantics=("parallel", "parallel"),
            vmem_limit_bytes=32 * 1024 * 1024,
        ),
    )(x3, weight_oc_ic)

    # Free reshape back to NCDHW semantics.
    return out3.reshape(N, C_out, D, H, W)


if __name__ == "__main__":
    # Small shapes consistent with the module: dim=8 input channels,
    # num_classes=4, batch=2, spatial 16x16x16.
    N, dim, num_classes = 2, 8, 4
    D = H = W = 16

    key = jax.random.PRNGKey(0)
    kx, kw = jax.random.split(key)
    x = jax.random.normal(kx, (N, dim, D, H, W), dtype=jnp.float32)
    # "Conv3d(dim, num_classes, 1, bias=False)" weight:
    # PyTorch shape (num_classes, dim, 1, 1, 1) squeezed to (num_classes, dim).
    weight = jax.random.normal(kw, (num_classes, dim), dtype=jnp.float32) * 0.1

    out = deep_supervision(x, weight)
    out = jax.block_until_ready(out)

    # Reference: 1x1x1 conv == einsum over the channel dim.
    ref = jnp.einsum("ncdhw,oc->nodhw", x, weight)
    assert out.shape == (N, num_classes, D, H, W)
    assert jnp.allclose(out, ref, atol=1e-5, rtol=1e-5), float(
        jnp.max(jnp.abs(out - ref))
    )

    print("KERNEL_OK")
</pallas_src>

<mosaic_0001>
module attributes {stable_mosaic.version = 11 : i64} {
  func.func @_proj_kernel(%arg0: i32, %arg1: i32, %arg2: memref<1x8x4096xf32, #tpu.memory_space<vmem>>, %arg3: memref<4x8xf32, #tpu.memory_space<vmem>>, %arg4: memref<1x4x4096xf32, #tpu.memory_space<vmem>>) attributes {dimension_semantics = [#tpu.dimension_semantics<parallel>, #tpu.dimension_semantics<parallel>], iteration_bounds = array<i64: 2, 1>, scalar_prefetch = 0 : i64, scratch_operands = 0 : i64, tpu.core_type = #tpu.core_type<tc>, window_params = [{transform_indices = @transform_0, window_bounds = array<i64: 1, 8, 4096>}, {pipeline_mode = #tpu.pipeline_mode<synchronous>, transform_indices = @transform_1, window_bounds = array<i64: 4, 8>}, {transform_indices = @transform_2, window_bounds = array<i64: 1, 4, 4096>}]} {
    %c0 = arith.constant 0 : index
    %c0_0 = arith.constant 0 : index
    %0 = vector.load %arg3[%c0, %c0_0] : memref<4x8xf32, #tpu.memory_space<vmem>>, vector<4x8xf32>
    %c0_1 = arith.constant 0 : index
    %c0_2 = arith.constant 0 : index
    %c0_3 = arith.constant 0 : index
    %1 = vector.load %arg2[%c0_1, %c0_2, %c0_3] : memref<1x8x4096xf32, #tpu.memory_space<vmem>>, vector<1x8x4096xf32>
    %2 = vector.shape_cast %1 : vector<1x8x4096xf32> to vector<8x4096xf32>
    %3 = vector.extract_strided_slice %0 {offsets = [0, 0], sizes = [4, 1], strides = [1, 1]} : vector<4x8xf32> to vector<4x1xf32>
    %4 = vector.extract_strided_slice %2 {offsets = [0, 0], sizes = [1, 4096], strides = [1, 1]} : vector<8x4096xf32> to vector<1x4096xf32>
    %5 = vector.broadcast %3 : vector<4x1xf32> to vector<4x4096xf32>
    %6 = vector.broadcast %4 : vector<1x4096xf32> to vector<4x4096xf32>
    %7 = arith.mulf %5, %6 : vector<4x4096xf32>
    %8 = vector.extract_strided_slice %0 {offsets = [0, 1], sizes = [4, 1], strides = [1, 1]} : vector<4x8xf32> to vector<4x1xf32>
    %9 = vector.extract_strided_slice %2 {offsets = [1, 0], sizes = [1, 4096], strides = [1, 1]} : vector<8x4096xf32> to vector<1x4096xf32>
    %10 = vector.broadcast %8 : vector<4x1xf32> to vector<4x4096xf32>
    %11 = vector.broadcast %9 : vector<1x4096xf32> to vector<4x4096xf32>
    %12 = arith.mulf %10, %11 : vector<4x4096xf32>
    %13 = arith.addf %7, %12 : vector<4x4096xf32>
    %14 = vector.extract_strided_slice %0 {offsets = [0, 2], sizes = [4, 1], strides = [1, 1]} : vector<4x8xf32> to vector<4x1xf32>
    %15 = vector.extract_strided_slice %2 {offsets = [2, 0], sizes = [1, 4096], strides = [1, 1]} : vector<8x4096xf32> to vector<1x4096xf32>
    %16 = vector.broadcast %14 : vector<4x1xf32> to vector<4x4096xf32>
    %17 = vector.broadcast %15 : vector<1x4096xf32> to vector<4x4096xf32>
    %18 = arith.mulf %16, %17 : vector<4x4096xf32>
    %19 = arith.addf %13, %18 : vector<4x4096xf32>
    %20 = vector.extract_strided_slice %0 {offsets = [0, 3], sizes = [4, 1], strides = [1, 1]} : vector<4x8xf32> to vector<4x1xf32>
    %21 = vector.extract_strided_slice %2 {offsets = [3, 0], sizes = [1, 4096], strides = [1, 1]} : vector<8x4096xf32> to vector<1x4096xf32>
    %22 = vector.broadcast %20 : vector<4x1xf32> to vector<4x4096xf32>
    %23 = vector.broadcast %21 : vector<1x4096xf32> to vector<4x4096xf32>
    %24 = arith.mulf %22, %23 : vector<4x4096xf32>
    %25 = arith.addf %19, %24 : vector<4x4096xf32>
    %26 = vector.extract_strided_slice %0 {offsets = [0, 4], sizes = [4, 1], strides = [1, 1]} : vector<4x8xf32> to vector<4x1xf32>
    %27 = vector.extract_strided_slice %2 {offsets = [4, 0], sizes = [1, 4096], strides = [1, 1]} : vector<8x4096xf32> to vector<1x4096xf32>
    %28 = vector.broadcast %26 : vector<4x1xf32> to vector<4x4096xf32>
    %29 = vector.broadcast %27 : vector<1x4096xf32> to vector<4x4096xf32>
    %30 = arith.mulf %28, %29 : vector<4x4096xf32>
    %31 = arith.addf %25, %30 : vector<4x4096xf32>
    %32 = vector.extract_strided_slice %0 {offsets = [0, 5], sizes = [4, 1], strides = [1, 1]} : vector<4x8xf32> to vector<4x1xf32>
    %33 = vector.extract_strided_slice %2 {offsets = [5, 0], sizes = [1, 4096], strides = [1, 1]} : vector<8x4096xf32> to vector<1x4096xf32>
    %34 = vector.broadcast %32 : vector<4x1xf32> to vector<4x4096xf32>
    %35 = vector.broadcast %33 : vector<1x4096xf32> to vector<4x4096xf32>
    %36 = arith.mulf %34, %35 : vector<4x4096xf32>
    %37 = arith.addf %31, %36 : vector<4x4096xf32>
    %38 = vector.extract_strided_slice %0 {offsets = [0, 6], sizes = [4, 1], strides = [1, 1]} : vector<4x8xf32> to vector<4x1xf32>
    %39 = vector.extract_strided_slice %2 {offsets = [6, 0], sizes = [1, 4096], strides = [1, 1]} : vector<8x4096xf32> to vector<1x4096xf32>
    %40 = vector.broadcast %38 : vector<4x1xf32> to vector<4x4096xf32>
    %41 = vector.broadcast %39 : vector<1x4096xf32> to vector<4x4096xf32>
    %42 = arith.mulf %40, %41 : vector<4x4096xf32>
    %43 = arith.addf %37, %42 : vector<4x4096xf32>
    %44 = vector.extract_strided_slice %0 {offsets = [0, 7], sizes = [4, 1], strides = [1, 1]} : vector<4x8xf32> to vector<4x1xf32>
    %45 = vector.extract_strided_slice %2 {offsets = [7, 0], sizes = [1, 4096], strides = [1, 1]} : vector<8x4096xf32> to vector<1x4096xf32>
    %46 = vector.broadcast %44 : vector<4x1xf32> to vector<4x4096xf32>
    %47 = vector.broadcast %45 : vector<1x4096xf32> to vector<4x4096xf32>
    %48 = arith.mulf %46, %47 : vector<4x4096xf32>
    %49 = arith.addf %43, %48 : vector<4x4096xf32>
    %c0_4 = arith.constant 0 : index
    %c0_5 = arith.constant 0 : index
    %c0_6 = arith.constant 0 : index
    %50 = vector.load %arg4[%c0_4, %c0_5, %c0_6] : memref<1x4x4096xf32, #tpu.memory_space<vmem>>, vector<1x4x4096xf32>
    %51 = vector.shape_cast %50 : vector<1x4x4096xf32> to vector<4x4096xf32>
    %52 = vector.shape_cast %49 : vector<4x4096xf32> to vector<1x4x4096xf32>
    tpu.vector_store %arg4[%c0_4, %c0_5, %c0_6], %52 {strides = array<i32>} : memref<1x4x4096xf32, #tpu.memory_space<vmem>>, vector<1x4x4096xf32>,
    return
  }
  func.func @transform_0(%arg0: i32, %arg1: i32) -> (i32, i32, i32) {
    %c0_i32 = arith.constant 0 : i32
    %c0_i32_0 = arith.constant 0 : i32
    return %arg0, %c0_i32, %arg1 : i32, i32, i32
  }
  func.func @transform_1(%arg0: i32, %arg1: i32) -> (i32, i32) {
    %c0_i32 = arith.constant 0 : i32
    %c0_i32_0 = arith.constant 0 : i32
    %c0_i32_1 = arith.constant 0 : i32
    return %c0_i32, %c0_i32_0 : i32, i32
  }
  func.func @transform_2(%arg0: i32, %arg1: i32) -> (i32, i32, i32) {
    %c0_i32 = arith.constant 0 : i32
    %c0_i32_0 = arith.constant 0 : i32
    return %arg0, %c0_i32, %arg1 : i32, i32, i32
  }
}

</mosaic_0001>

<llo_original>
// kernel: tpu_custom_call.1
$region0: #{tpu_custom_call.1}
  #allocation0 [shape = 'u32[]', space=smem, size = 0x4, offset = 0x4, fixed_abs, tag = 'smem constant byte address 0x4 - core index']
  #allocation1 [shape = 'u32[144,128]{1,0:T(1,128)}', space=vmem, size = 0x12000, scoped, tag = 'internal scratch']
  %s0 = inlined_call_operand.hbm [shape: f32[2,8,4096], index: 0, kind: input, shape index: {}]
  %s1 = inlined_call_operand.hbm [shape: f32[4,8], index: 1, kind: input, shape index: {}]
  %s2 = inlined_call_operand.hbm [shape: f32[2,4,4096], index: 2, kind: output, shape index: {}]
  %s3 = sld [smem:[#allocation0]]
  $region49: #{tpu_custom_call.1} parent=0
    _
  %s5 = ssub.s32 1, %s3
  %s6 = scalar_select 0, %s5, %s3
  $region1: #{tpu_custom_call.1} parent=0
    #allocation2 [shape = 'u8[262144]{0}', space=vmem, size = 0x40000, scoped, tag = 'input window, operand 0']
    #allocation3 [shape = 's32[2]{0}', space=sflag, size = 0x8, scoped, tag = 'scoped memory for tpu_custom_call.1']
    #allocation4 [shape = 's32[2]{0}', space=sflag, size = 0x8, scoped, tag = 'scoped memory for tpu_custom_call.1']
    #allocation5 [shape = 'u8[2048]{0}', space=vmem, size = 0x800, scoped, tag = 'input window, operand 1, single buffered']
    #allocation6 [shape = 's32[1]{0}', space=sflag, size = 0x4, scoped, tag = 'scoped memory for tpu_custom_call.1']
    #allocation7 [shape = 'u8[131072]{0}', space=vmem, size = 0x20000, scoped, tag = 'output window, operand 0']
    %7 = vsyncpa [#allocation3], 0
    %s8 = scalar_lea.sflag [#allocation3], 1
    %9 = vsyncpa %s8, 0
    %10 = vsyncpa [#allocation6], 0
    %11 = vsyncpa [#allocation4], 0
    %s12 = scalar_lea.sflag [#allocation4], 1
    %13 = vsyncpa %s12, 0
    loop: start=0, step=1, limit=4
    $region2: #{tpu_custom_call.1} parent=1 // loop_pre_header
      _
    $region3: #{tpu_custom_call.1} parent=1 // loop_header
      %s15 = sphi 0, %s19
      %p16 = scmp.ge.s32.totalorder %s15, 4
      %s22 = sphi 0, %s34
      %s23 = sphi 0, %s30
      %s24 = sphi 0, %s22
      %s25 = sphi 0, %s23
      %s26 = sphi 0, %s24
      %s27 = sphi 0, %s25
      %s39 = sphi 0, %s41
      %s42 = sphi 0, %s39
      %s43 = sphi 0, %s42
      %s59 = sphi 0, %s43
      %s63 = sphi 0, %s63
      %s65 = sphi 0, %s63
      %s66 = sphi 0, %s65
      %s80 = sphi 0, %s66
      %s88 = sphi 0, %s90
      %s91 = sphi 0, %s88
      %s92 = sphi 0, %s91
      %s108 = sphi 0, %s92
    $region4: #{tpu_custom_call.1} parent=1 // loop_header_branch
      %18 = sbr.rel (%p16) target = $region8
    $region5: #{tpu_custom_call.1} parent=1 // loop_body
      %s20 = ssub.s32 %s15, 1
      %s21 = ssub.s32 %s15, 2
      %s28 = sadd.s32 1, %s23
      %p29 = scmp.ge.s32.totalorder %s28, 1
      %s30 = scalar_select %p29, 0, %s28
      %s31 = sadd.s32 1, %s22
      %s32 = scalar_select %p29, %s31, %s22
      %p33 = scmp.ge.s32.totalorder %s32, 2
      %s34 = scalar_select %p33, 0, %s32
      %s35 = ssub.s32 %s22, %s34
      %s36 = ssub.s32 %s23, %s30
      %s37 = sor.u32 %s35, %s36
      %p38 = scmp.eq.s32.totalorder %s37, 0
      %s40 = sadd.s32 %s39, 1
      %s41 = scalar_select %p38, %s39, %s40
      %p44 = pneg %p38
      %p45 = scmp.eq.s32.totalorder %s15, 1
      %p46 = por %p44, %p45
      %p47 = scmp.ne.s32.totalorder %s39, %s42
      %p48 = scmp.eq.s32.totalorder %s15, 0
      %p49 = por %p47, %p48
      %p50 = scmp.ne.s32.totalorder %s39, %s42
      %p51 = scmp.eq.s32.totalorder %s20, 1
      %p52 = por %p50, %p51
      %p53 = scmp.ne.s32.totalorder %s42, %s43
      %p54 = scmp.eq.s32.totalorder %s20, 0
      %p55 = por %p53, %p54
      %p56 = scmp.ne.s32.totalorder %s42, %s43
      %p57 = scmp.eq.s32.totalorder %s21, 1
      %p58 = por %p56, %p57
      %p60 = scmp.ne.s32.totalorder %s43, %s59
      %p61 = scmp.eq.s32.totalorder %s21, 0
      %p62 = por %p60, %p61
      %s64 = sadd.s32 %s63, 1
      %p67 = scmp.eq.s32.totalorder %s15, 1
      %p68 = scmp.ne.s32.totalorder %s63, %s65
      %p69 = scmp.eq.s32.totalorder %s15, 0
      %p70 = por %p68, %p69
      %p71 = scmp.ne.s32.totalorder %s63, %s65
      %p72 = scmp.eq.s32.totalorder %s20, 1
      %p73 = por %p71, %p72
      %p74 = scmp.ne.s32.totalorder %s65, %s66
      %p75 = scmp.eq.s32.totalorder %s20, 0
      %p76 = por %p74, %p75
      %p77 = scmp.ne.s32.totalorder %s65, %s66
      %p78 = scmp.eq.s32.totalorder %s21, 1
      %p79 = por %p77, %p78
      %p81 = scmp.ne.s32.totalorder %s66, %s80
      %p82 = scmp.eq.s32.totalorder %s21, 0
      %p83 = por %p81, %p82
      %s84 = ssub.s32 %s22, %s34
      %s85 = ssub.s32 %s23, %s30
      %s86 = sor.u32 %s84, %s85
      %p87 = scmp.eq.s32.totalorder %s86, 0
      %s89 = sadd.s32 %s88, 1
      %s90 = scalar_select %p87, %s88, %s89
      %p93 = pneg %p87
      %p94 = scmp.eq.s32.totalorder %s15, 1
      %p95 = por %p93, %p94
      %p96 = scmp.ne.s32.totalorder %s88, %s91
      %p97 = scmp.eq.s32.totalorder %s15, 0
      %p98 = por %p96, %p97
      %p99 = scmp.ne.s32.totalorder %s88, %s91
      %p100 = scmp.eq.s32.totalorder %s20, 1
      %p101 = por %p99, %p100
      %p102 = scmp.ne.s32.totalorder %s91, %s92
      %p103 = scmp.eq.s32.totalorder %s20, 0
      %p104 = por %p102, %p103
      %p105 = scmp.ne.s32.totalorder %s91, %s92
      %p106 = scmp.eq.s32.totalorder %s21, 1
      %p107 = por %p105, %p106
      %p109 = scmp.ne.s32.totalorder %s92, %s108
      %p110 = scmp.eq.s32.totalorder %s21, 0
      %p111 = por %p109, %p110
      %p112 = scmp.le.s32.totalorder 1, %s15
      %p113 = scmp.lt.s32.totalorder %s15, 3
      %p114 = pnand %p112, %p113
      %p115 = pneg %p114
      // Predicated region
      $region9: #{tpu_custom_call.1} parent=5 // pred_check
        _
      $region10: #{tpu_custom_call.1} parent=5 // pred_check_branch
        %117 = sbr.rel (%p114) target = $region12
      $region11: #{tpu_custom_call.1} parent=5 // pred_region
        %s118 = ssub.s32 %s15, 1
        // Predicated region
        $region13: #{tpu_custom_call.1} parent=11 // pred_check
          %p119 = pneg %p76
        $region14: #{tpu_custom_call.1} parent=11 // pred_check_branch
          %121 = sbr.rel (%p119) target = $region16
        $region15: #{tpu_custom_call.1} parent=11 // pred_region
          %s123 = ssub.s32 64, 64
          %124 = vsyncadd [#allocation6], %s123
          %s126 = sshll.u32 [#allocation5], 4
          %s127 = int_to_ptr.vmem [resolvable:$true] %s126
          %129 = dma.hbm_to_vmem [thread:$0]  %s1, 64, %s127, [#allocation6]
        $region16: #{tpu_custom_call.1} parent=11 // pred_fallthru
          _
      $region12: #{tpu_custom_call.1} parent=5 // pred_fallthru
        _
      %p130 = scmp.lt.s32.totalorder %s15, 2
      // Predicated region
      $region17: #{tpu_custom_call.1} parent=5 // pred_check
        %p131 = pneg %p130
      $region18: #{tpu_custom_call.1} parent=5 // pred_check_branch
        %133 = sbr.rel (%p131) target = $region20
      $region19: #{tpu_custom_call.1} parent=5 // pred_region
        // Predicated region
        $region21: #{tpu_custom_call.1} parent=19 // pred_check
          %p134 = pneg %p49
        $region22: #{tpu_custom_call.1} parent=19 // pred_check_branch
          %136 = sbr.rel (%p134) target = $region24
        $region23: #{tpu_custom_call.1} parent=19 // pred_region
          %s137 = sand.u32 %s39, 1
          %s138 = scalar_lea.sflag [#allocation3], %s137
          %s139 = sand.u32 %s39, 1
          %s140 = smul.addr %s139, 256
          %s141 = scalar_lea.vmem [#allocation2], %s140
          %s142 = smul.u32 32, %s23
          %s144 = ssub.s32 4096, 4096
          %145 = vsyncadd %s138, %s144
          %s146 = smul.addr %s22, 32
          %s147 = sadd.s32 %s142, %s146
          %s148 = smul.addr %s147, 128
          %s149 = scalar_lea.hbm %s0, %s148
          %s151 = sshll.u32 %s141, 4
          %s152 = int_to_ptr.vmem [resolvable:$true] %s151
          %154 = dma.hbm_to_vmem [thread:$0]  %s149, 4096, %s152, %s138
        $region24: #{tpu_custom_call.1} parent=19 // pred_fallthru
          _
      $region20: #{tpu_custom_call.1} parent=5 // pred_fallthru
        _
      %p155 = scmp.le.s32.totalorder 1, %s15
      %p156 = scmp.lt.s32.totalorder %s15, 3
      %p157 = pnand %p155, %p156
      %p158 = pneg %p157
      // Predicated region
      $region25: #{tpu_custom_call.1} parent=5 // pred_check
        _
      $region26: #{tpu_custom_call.1} parent=5 // pred_check_branch
        %160 = sbr.rel (%p157) target = $region28
      $region27: #{tpu_custom_call.1} parent=5 // pred_region
        %s161 = ssub.s32 %s15, 1
        %s162 = sand.u32 %s42, 1
        %s163 = scalar_lea.sflag [#allocation3], %s162
        %s164 = sand.u32 %s42, 1
        %s165 = smul.addr %s164, 256
        %s166 = scalar_lea.vmem [#allocation2], %s165
        // Predicated region
        $region29: #{tpu_custom_call.1} parent=27 // pred_check
          %p167 = pneg %p55
        $region30: #{tpu_custom_call.1} parent=27 // pred_check_branch
          %169 = sbr.rel (%p167) target = $region32
        $region31: #{tpu_custom_call.1} parent=27 // pred_region
          %170 = dma.done %s163, 4096
        $region32: #{tpu_custom_call.1} parent=27 // pred_fallthru
          _
        // Predicated region
        $region33: #{tpu_custom_call.1} parent=27 // pred_check
          %p171 = pneg %p76
        $region34: #{tpu_custom_call.1} parent=27 // pred_check_branch
          %173 = sbr.rel (%p171) target = $region36
        $region35: #{tpu_custom_call.1} parent=27 // pred_region
          %174 = dma.done [#allocation6], 64
        $region36: #{tpu_custom_call.1} parent=27 // pred_fallthru
          _
        %s175 = sand.u32 %s42, 1
        %s176 = scalar_lea.sflag [#allocation3], %s175
        %s177 = sand.u32 %s42, 1
        %s178 = smul.addr %s177, 256
        %s179 = scalar_lea.vmem [#allocation2], %s178
        %p180 = pneg %p55
        %p181 = pneg %p52
        %p182 = pneg %p76
        %p183 = pneg %p73
        %p184 = pneg %p104
        %p185 = pneg %p101
        %s186 = sand.u32 %s91, 1
        %s187 = scalar_lea.sflag [#allocation4], %s186
        %s188 = sand.u32 %s91, 1
        %s189 = smul.addr %s188, 128
        %s190 = scalar_lea.vmem [#allocation7], %s189
        %s191 = smul.u32 32, %s25
        %s192 = smul.u32 32, %s25
        %v193 = vld [vmem:[#allocation5] sm:$0xf]
        %v194 = vld [vmem:[%s166] sm:$0xff]
        %v195 = vld [vmem:[%s166 + $0x8] sm:$0xff]
        %v196 = vld [vmem:[%s166 + $0x10] sm:$0xff]
        %v197 = vld [vmem:[%s166 + $0x18] sm:$0xff]
        %v198 = vld [vmem:[%s166 + $0x20] sm:$0xff]
        %v199 = vld [vmem:[%s166 + $0x28] sm:$0xff]
        %v200 = vld [vmem:[%s166 + $0x30] sm:$0xff]
        %v201 = vld [vmem:[%s166 + $0x38] sm:$0xff]
        %v202 = vld [vmem:[%s166 + $0x40] sm:$0xff]
        %v203 = vld [vmem:[%s166 + $0x48] sm:$0xff]
        %v204 = vld [vmem:[%s166 + $0x50] sm:$0xff]
        %v205 = vld [vmem:[%s166 + $0x58] sm:$0xff]
        %v206 = vld [vmem:[%s166 + $0x60] sm:$0xff]
        %v207 = vld [vmem:[%s166 + $0x68] sm:$0xff]
        %v208 = vld [vmem:[%s166 + $0x70] sm:$0xff]
        %v209 = vld [vmem:[%s166 + $0x78] sm:$0xff]
        %v210 = vld [vmem:[%s166 + $0x80] sm:$0xff]
        %v211 = vld [vmem:[%s166 + $0x88] sm:$0xff]
        %v212 = vld [vmem:[%s166 + $0x90] sm:$0xff]
        %v213 = vld [vmem:[%s166 + $0x98] sm:$0xff]
        %v214 = vld [vmem:[%s166 + $0xa0] sm:$0xff]
        %v215 = vld [vmem:[%s166 + $0xa8] sm:$0xff]
        %v216 = vld [vmem:[%s166 + $0xb0] sm:$0xff]
        %v217 = vld [vmem:[%s166 + $0xb8] sm:$0xff]
        %v218 = vld [vmem:[%s166 + $0xc0] sm:$0xff]
        %v219 = vld [vmem:[%s166 + $0xc8] sm:$0xff]
        %v220 = vld [vmem:[%s166 + $0xd0] sm:$0xff]
        %v221 = vld [vmem:[%s166 + $0xd8] sm:$0xff]
        %v222 = vld [vmem:[%s166 + $0xe0] sm:$0xff]
        %v223 = vld [vmem:[%s166 + $0xe8] sm:$0xff]
        %v224 = vld [vmem:[%s166 + $0xf0] sm:$0xff]
        %v225 = vld [vmem:[%s166 + $0xf8] sm:$0xff]
        %227 = vset.pattern.permute.xlu0 0
        %228 = vperm.xlu0 %227, %v193
        %v229 = vpop.permute.xlu0 %228
        %v231 = vlaneseq
        %v232 = vshrl.u32 %v231, 7
        %v233 = vsub.s32 0, %v232
        %v234 = vrot.slane %v194, %v233
        %v235 = vlaneseq
        %v236 = vshrl.u32 %v235, 7
        %v237 = vsub.s32 0, %v236
        %v238 = vrot.slane %v195, %v237
        %v239 = vlaneseq
        %v240 = vshrl.u32 %v239, 7
        %v241 = vsub.s32 0, %v240
        %v242 = vrot.slane %v196, %v241
        %v243 = vlaneseq
        %v244 = vshrl.u32 %v243, 7
        %v245 = vsub.s32 0, %v244
        %v246 = vrot.slane %v197, %v245
        %v247 = vlaneseq
        %v248 = vshrl.u32 %v247, 7
        %v249 = vsub.s32 0, %v248
        %v250 = vrot.slane %v198, %v249
        %v251 = vlaneseq
        %v252 = vshrl.u32 %v251, 7
        %v253 = vsub.s32 0, %v252
        %v254 = vrot.slane %v199, %v253
        %v255 = vlaneseq
        %v256 = vshrl.u32 %v255, 7
        %v257 = vsub.s32 0, %v256
        %v258 = vrot.slane %v200, %v257
        %v259 = vlaneseq
        %v260 = vshrl.u32 %v259, 7
        %v261 = vsub.s32 0, %v260
        %v262 = vrot.slane %v201, %v261
        %v263 = vlaneseq
        %v264 = vshrl.u32 %v263, 7
        %v265 = vsub.s32 0, %v264
        %v266 = vrot.slane %v202, %v265
        %v267 = vlaneseq
        %v268 = vshrl.u32 %v267, 7
        %v269 = vsub.s32 0, %v268
        %v270 = vrot.slane %v203, %v269
        %v271 = vlaneseq
        %v272 = vshrl.u32 %v271, 7
        %v273 = vsub.s32 0, %v272
        %v274 = vrot.slane %v204, %v273
        %v275 = vlaneseq
        %v276 = vshrl.u32 %v275, 7
        %v277 = vsub.s32 0, %v276
        %v278 = vrot.slane %v205, %v277
        %v279 = vlaneseq
        %v280 = vshrl.u32 %v279, 7
        %v281 = vsub.s32 0, %v280
        %v282 = vrot.slane %v206, %v281
        %v283 = vlaneseq
        %v284 = vshrl.u32 %v283, 7
        %v285 = vsub.s32 0, %v284
        %v286 = vrot.slane %v207, %v285
        %v287 = vlaneseq
        %v288 = vshrl.u32 %v287, 7
        %v289 = vsub.s32 0, %v288
        %v290 = vrot.slane %v208, %v289
        %v291 = vlaneseq
        %v292 = vshrl.u32 %v291, 7
        %v293 = vsub.s32 0, %v292
        %v294 = vrot.slane %v209, %v293
        %v295 = vlaneseq
        %v296 = vshrl.u32 %v295, 7
        %v297 = vsub.s32 0, %v296
        %v298 = vrot.slane %v210, %v297
        %v299 = vlaneseq
        %v300 = vshrl.u32 %v299, 7
        %v301 = vsub.s32 0, %v300
        %v302 = vrot.slane %v211, %v301
        %v303 = vlaneseq
        %v304 = vshrl.u32 %v303, 7
        %v305 = vsub.s32 0, %v304
        %v306 = vrot.slane %v212, %v305
        %v307 = vlaneseq
        %v308 = vshrl.u32 %v307, 7
        %v309 = vsub.s32 0, %v308
        %v310 = vrot.slane %v213, %v309
        %v311 = vlaneseq
        %v312 = vshrl.u32 %v311, 7
        %v313 = vsub.s32 0, %v312
        %v314 = vrot.slane %v214, %v313
        %v315 = vlaneseq
        %v316 = vshrl.u32 %v315, 7
        %v317 = vsub.s32 0, %v316
        %v318 = vrot.slane %v215, %v317
        %v319 = vlaneseq
        %v320 = vshrl.u32 %v319, 7
        %v321 = vsub.s32 0, %v320
        %v322 = vrot.slane %v216, %v321
        %v323 = vlaneseq
        %v324 = vshrl.u32 %v323, 7
        %v325 = vsub.s32 0, %v324
        %v326 = vrot.slane %v217, %v325
        %v327 = vlaneseq
        %v328 = vshrl.u32 %v327, 7
        %v329 = vsub.s32 0, %v328
        %v330 = vrot.slane %v218, %v329
        %v331 = vlaneseq
        %v332 = vshrl.u32 %v331, 7
        %v333 = vsub.s32 0, %v332
        %v334 = vrot.slane %v219, %v333
        %v335 = vlaneseq
        %v336 = vshrl.u32 %v335, 7
        %v337 = vsub.s32 0, %v336
        %v338 = vrot.slane %v220, %v337
        %v339 = vlaneseq
        %v340 = vshrl.u32 %v339, 7
        %v341 = vsub.s32 0, %v340
        %v342 = vrot.slane %v221, %v341
        %v343 = vlaneseq
        %v344 = vshrl.u32 %v343, 7
        %v345 = vsub.s32 0, %v344
        %v346 = vrot.slane %v222, %v345
        %v347 = vlaneseq
        %v348 = vshrl.u32 %v347, 7
        %v349 = vsub.s32 0, %v348
        %v350 = vrot.slane %v223, %v349
        %v351 = vlaneseq
        %v352 = vshrl.u32 %v351, 7
        %v353 = vsub.s32 0, %v352
        %v354 = vrot.slane %v224, %v353
        %v355 = vlaneseq
        %v356 = vshrl.u32 %v355, 7
        %v357 = vsub.s32 0, %v356
        %v358 = vrot.slane %v225, %v357
        %v359 = vmul.f32 %v229, %v234
        %v360 = vmul.f32 %v229, %v238
        %v361 = vmul.f32 %v229, %v242
        %v362 = vmul.f32 %v229, %v246
        %v363 = vmul.f32 %v229, %v250
        %v364 = vmul.f32 %v229, %v254
        %v365 = vmul.f32 %v229, %v258
        %v366 = vmul.f32 %v229, %v262
        %v367 = vmul.f32 %v229, %v266
        %v368 = vmul.f32 %v229, %v270
        %v369 = vmul.f32 %v229, %v274
        %v370 = vmul.f32 %v229, %v278
        %v371 = vmul.f32 %v229, %v282
        %v372 = vmul.f32 %v229, %v286
        %v373 = vmul.f32 %v229, %v290
        %v374 = vmul.f32 %v229, %v294
        %v375 = vmul.f32 %v229, %v298
        %v376 = vmul.f32 %v229, %v302
        %v377 = vmul.f32 %v229, %v306
        %v378 = vmul.f32 %v229, %v310
        %v379 = vmul.f32 %v229, %v314
        %v380 = vmul.f32 %v229, %v318
        %v381 = vmul.f32 %v229, %v322
        %v382 = vmul.f32 %v229, %v326
        %v383 = vmul.f32 %v229, %v330
        %v384 = vmul.f32 %v229, %v334
        %v385 = vmul.f32 %v229, %v338
        %v386 = vmul.f32 %v229, %v342
        %v387 = vmul.f32 %v229, %v346
        %v388 = vmul.f32 %v229, %v350
        %v389 = vmul.f32 %v229, %v354
        %v390 = vmul.f32 %v229, %v358
        %391 = vset.pattern.permute.xlu0 1
        %392 = vperm.xlu0 %391, %v193
        %v393 = vpop.permute.xlu0 %392
        %v395 = vlaneseq
        %v396 = vshrl.u32 %v395, 7
        %v397 = vsub.s32 1, %v396
        %v398 = vrot.slane %v194, %v397
        %v399 = vlaneseq
        %v400 = vshrl.u32 %v399, 7
        %v401 = vsub.s32 1, %v400
        %v402 = vrot.slane %v195, %v401
        %v403 = vlaneseq
        %v404 = vshrl.u32 %v403, 7
        %v405 = vsub.s32 1, %v404
        %v406 = vrot.slane %v196, %v405
        %v407 = vlaneseq
        %v408 = vshrl.u32 %v407, 7
        %v409 = vsub.s32 1, %v408
        %v410 = vrot.slane %v197, %v409
        %v411 = vlaneseq
        %v412 = vshrl.u32 %v411, 7
        %v413 = vsub.s32 1, %v412
        %v414 = vrot.slane %v198, %v413
        %v415 = vlaneseq
        %v416 = vshrl.u32 %v415, 7
        %v417 = vsub.s32 1, %v416
        %v418 = vrot.slane %v199, %v417
        %v419 = vlaneseq
        %v420 = vshrl.u32 %v419, 7
        %v421 = vsub.s32 1, %v420
        %v422 = vrot.slane %v200, %v421
        %v423 = vlaneseq
        %v424 = vshrl.u32 %v423, 7
        %v425 = vsub.s32 1, %v424
        %v426 = vrot.slane %v201, %v425
        %v427 = vlaneseq
        %v428 = vshrl.u32 %v427, 7
        %v429 = vsub.s32 1, %v428
        %v430 = vrot.slane %v202, %v429
        %v431 = vlaneseq
        %v432 = vshrl.u32 %v431, 7
        %v433 = vsub.s32 1, %v432
        %v434 = vrot.slane %v203, %v433
        %v435 = vlaneseq
        %v436 = vshrl.u32 %v435, 7
        %v437 = vsub.s32 1, %v436
        %v438 = vrot.slane %v204, %v437
        %v439 = vlaneseq
        %v440 = vshrl.u32 %v439, 7
        %v441 = vsub.s32 1, %v440
        %v442 = vrot.slane %v205, %v441
        %v443 = vlaneseq
        %v444 = vshrl.u32 %v443, 7
        %v445 = vsub.s32 1, %v444
        %v446 = vrot.slane %v206, %v445
        %v447 = vlaneseq
        %v448 = vshrl.u32 %v447, 7
        %v449 = vsub.s32 1, %v448
        %v450 = vrot.slane %v207, %v449
        %v451 = vlaneseq
        %v452 = vshrl.u32 %v451, 7
        %v453 = vsub.s32 1, %v452
        %v454 = vrot.slane %v208, %v453
        %v455 = vlaneseq
        %v456 = vshrl.u32 %v455, 7
        %v457 = vsub.s32 1, %v456
        %v458 = vrot.slane %v209, %v457
        %v459 = vlaneseq
        %v460 = vshrl.u32 %v459, 7
        %v461 = vsub.s32 1, %v460
        %v462 = vrot.slane %v210, %v461
        %v463 = vlaneseq
        %v464 = vshrl.u32 %v463, 7
        %v465 = vsub.s32 1, %v464
        %v466 = vrot.slane %v211, %v465
        %v467 = vlaneseq
        %v468 = vshrl.u32 %v467, 7
        %v469 = vsub.s32 1, %v468
        %v470 = vrot.slane %v212, %v469
        %v471 = vlaneseq
        %v472 = vshrl.u32 %v471, 7
        %v473 = vsub.s32 1, %v472
        %v474 = vrot.slane %v213, %v473
        %v475 = vlaneseq
        %v476 = vshrl.u32 %v475, 7
        %v477 = vsub.s32 1, %v476
        %v478 = vrot.slane %v214, %v477
        %v479 = vlaneseq
        %v480 = vshrl.u32 %v479, 7
        %v481 = vsub.s32 1, %v480
        %v482 = vrot.slane %v215, %v481
        %v483 = vlaneseq
        %v484 = vshrl.u32 %v483, 7
        %v485 = vsub.s32 1, %v484
        %v486 = vrot.slane %v216, %v485
        %v487 = vlaneseq
        %v488 = vshrl.u32 %v487, 7
        %v489 = vsub.s32 1, %v488
        %v490 = vrot.slane %v217, %v489
        %v491 = vlaneseq
        %v492 = vshrl.u32 %v491, 7
        %v493 = vsub.s32 1, %v492
        %v494 = vrot.slane %v218, %v493
        %v495 = vlaneseq
        %v496 = vshrl.u32 %v495, 7
        %v497 = vsub.s32 1, %v496
        %v498 = vrot.slane %v219, %v497
        %v499 = vlaneseq
        %v500 = vshrl.u32 %v499, 7
        %v501 = vsub.s32 1, %v500
        %v502 = vrot.slane %v220, %v501
        %v503 = vlaneseq
        %v504 = vshrl.u32 %v503, 7
        %v505 = vsub.s32 1, %v504
        %v506 = vrot.slane %v221, %v505
        %v507 = vlaneseq
        %v508 = vshrl.u32 %v507, 7
        %v509 = vsub.s32 1, %v508
        %v510 = vrot.slane %v222, %v509
        %v511 = vlaneseq
        %v512 = vshrl.u32 %v511, 7
        %v513 = vsub.s32 1, %v512
        %v514 = vrot.slane %v223, %v513
        %v515 = vlaneseq
        %v516 = vshrl.u32 %v515, 7
        %v517 = vsub.s32 1, %v516
        %v518 = vrot.slane %v224, %v517
        %v519 = vlaneseq
        %v520 = vshrl.u32 %v519, 7
        %v521 = vsub.s32 1, %v520
        %v522 = vrot.slane %v225, %v521
        %v523 = vmul.f32 %v393, %v398
        %v524 = vmul.f32 %v393, %v402
        %v525 = vmul.f32 %v393, %v406
        %v526 = vmul.f32 %v393, %v410
        %v527 = vmul.f32 %v393, %v414
        %v528 = vmul.f32 %v393, %v418
        %v529 = vmul.f32 %v393, %v422
        %v530 = vmul.f32 %v393, %v426
        %v531 = vmul.f32 %v393, %v430
        %v532 = vmul.f32 %v393, %v434
        %v533 = vmul.f32 %v393, %v438
        %v534 = vmul.f32 %v393, %v442
        %v535 = vmul.f32 %v393, %v446
        %v536 = vmul.f32 %v393, %v450
        %v537 = vmul.f32 %v393, %v454
        %v538 = vmul.f32 %v393, %v458
        %v539 = vmul.f32 %v393, %v462
        %v540 = vmul.f32 %v393, %v466
        %v541 = vmul.f32 %v393, %v470
        %v542 = vmul.f32 %v393, %v474
        %v543 = vmul.f32 %v393, %v478
        %v544 = vmul.f32 %v393, %v482
        %v545 = vmul.f32 %v393, %v486
        %v546 = vmul.f32 %v393, %v490
        %v547 = vmul.f32 %v393, %v494
        %v548 = vmul.f32 %v393, %v498
        %v549 = vmul.f32 %v393, %v502
        %v550 = vmul.f32 %v393, %v506
        %v551 = vmul.f32 %v393, %v510
        %v552 = vmul.f32 %v393, %v514
        %v553 = vmul.f32 %v393, %v518
        %v554 = vmul.f32 %v393, %v522
        %v555 = vadd.f32 %v359, %v523
        %v556 = vadd.f32 %v360, %v524
        %v557 = vadd.f32 %v361, %v525
        %v558 = vadd.f32 %v362, %v526
        %v559 = vadd.f32 %v363, %v527
        %v560 = vadd.f32 %v364, %v528
        %v561 = vadd.f32 %v365, %v529
        %v562 = vadd.f32 %v366, %v530
        %v563 = vadd.f32 %v367, %v531
        %v564 = vadd.f32 %v368, %v532
        %v565 = vadd.f32 %v369, %v533
        %v566 = vadd.f32 %v370, %v534
        %v567 = vadd.f32 %v371, %v535
        %v568 = vadd.f32 %v372, %v536
        %v569 = vadd.f32 %v373, %v537
        %v570 = vadd.f32 %v374, %v538
        %v571 = vadd.f32 %v375, %v539
        %v572 = vadd.f32 %v376, %v540
        %v573 = vadd.f32 %v377, %v541
        %v574 = vadd.f32 %v378, %v542
        %v575 = vadd.f32 %v379, %v543
        %v576 = vadd.f32 %v380, %v544
        %v577 = vadd.f32 %v381, %v545
        %v578 = vadd.f32 %v382, %v546
        %v579 = vadd.f32 %v383, %v547
        %v580 = vadd.f32 %v384, %v548
        %v581 = vadd.f32 %v385, %v549
        %v582 = vadd.f32 %v386, %v550
        %v583 = vadd.f32 %v387, %v551
        %v584 = vadd.f32 %v388, %v552
        %v585 = vadd.f32 %v389, %v553
        %v586 = vadd.f32 %v390, %v554
        %587 = vset.pattern.permute.xlu0 2
        %588 = vperm.xlu0 %587, %v193
        %v589 = vpop.permute.xlu0 %588
        %v591 = vlaneseq
        %v592 = vshrl.u32 %v591, 7
        %v593 = vsub.s32 2, %v592
        %v594 = vrot.slane %v194, %v593
        %v595 = vlaneseq
        %v596 = vshrl.u32 %v595, 7
        %v597 = vsub.s32 2, %v596
        %v598 = vrot.slane %v195, %v597
        %v599 = vlaneseq
        %v600 = vshrl.u32 %v599, 7
        %v601 = vsub.s32 2, %v600
        %v602 = vrot.slane %v196, %v601
        %v603 = vlaneseq
        %v604 = vshrl.u32 %v603, 7
        %v605 = vsub.s32 2, %v604
        %v606 = vrot.slane %v197, %v605
        %v607 = vlaneseq
        %v608 = vshrl.u32 %v607, 7
        %v609 = vsub.s32 2, %v608
        %v610 = vrot.slane %v198, %v609
        %v611 = vlaneseq
        %v612 = vshrl.u32 %v611, 7
        %v613 = vsub.s32 2, %v612
        %v614 = vrot.slane %v199, %v613
        %v615 = vlaneseq
        %v616 = vshrl.u32 %v615, 7
        %v617 = vsub.s32 2, %v616
        %v618 = vrot.slane %v200, %v617
        %v619 = vlaneseq
        %v620 = vshrl.u32 %v619, 7
        %v621 = vsub.s32 2, %v620
        %v622 = vrot.slane %v201, %v621
        %v623 = vlaneseq
        %v624 = vshrl.u32 %v623, 7
        %v625 = vsub.s32 2, %v624
        %v626 = vrot.slane %v202, %v625
        %v627 = vlaneseq
        %v628 = vshrl.u32 %v627, 7
        %v629 = vsub.s32 2, %v628
        %v630 = vrot.slane %v203, %v629
        %v631 = vlaneseq
        %v632 = vshrl.u32 %v631, 7
        %v633 = vsub.s32 2, %v632
        %v634 = vrot.slane %v204, %v633
        %v635 = vlaneseq
        %v636 = vshrl.u32 %v635, 7
        %v637 = vsub.s32 2, %v636
        %v638 = vrot.slane %v205, %v637
        %v639 = vlaneseq
        %v640 = vshrl.u32 %v639, 7
        %v641 = vsub.s32 2, %v640
        %v642 = vrot.slane %v206, %v641
        %v643 = vlaneseq
        %v644 = vshrl.u32 %v643, 7
        %v645 = vsub.s32 2, %v644
        %v646 = vrot.slane %v207, %v645
        %v647 = vlaneseq
        %v648 = vshrl.u32 %v647, 7
        %v649 = vsub.s32 2, %v648
        %v650 = vrot.slane %v208, %v649
        %v651 = vlaneseq
        %v652 = vshrl.u32 %v651, 7
        %v653 = vsub.s32 2, %v652
        %v654 = vrot.slane %v209, %v653
        %v655 = vlaneseq
        %v656 = vshrl.u32 %v655, 7
        %v657 = vsub.s32 2, %v656
        %v658 = vrot.slane %v210, %v657
        %v659 = vlaneseq
        %v660 = vshrl.u32 %v659, 7
        %v661 = vsub.s32 2, %v660
        %v662 = vrot.slane %v211, %v661
        %v663 = vlaneseq
        %v664 = vshrl.u32 %v663, 7
        %v665 = vsub.s32 2, %v664
        %v666 = vrot.slane %v212, %v665
        %v667 = vlaneseq
        %v668 = vshrl.u32 %v667, 7
        %v669 = vsub.s32 2, %v668
        %v670 = vrot.slane %v213, %v669
        %v671 = vlaneseq
        %v672 = vshrl.u32 %v671, 7
        %v673 = vsub.s32 2, %v672
        %v674 = vrot.slane %v214, %v673
        %v675 = vlaneseq
        %v676 = vshrl.u32 %v675, 7
        %v677 = vsub.s32 2, %v676
        %v678 = vrot.slane %v215, %v677
        %v679 = vlaneseq
        %v680 = vshrl.u32 %v679, 7
        %v681 = vsub.s32 2, %v680
        %v682 = vrot.slane %v216, %v681
        %v683 = vlaneseq
        %v684 = vshrl.u32 %v683, 7
        %v685 = vsub.s32 2, %v684
        %v686 = vrot.slane %v217, %v685
        %v687 = vlaneseq
        %v688 = vshrl.u32 %v687, 7
        %v689 = vsub.s32 2, %v688
        %v690 = vrot.slane %v218, %v689
        %v691 = vlaneseq
        %v692 = vshrl.u32 %v691, 7
        %v693 = vsub.s32 2, %v692
        %v694 = vrot.slane %v219, %v693
        %v695 = vlaneseq
        %v696 = vshrl.u32 %v695, 7
        %v697 = vsub.s32 2, %v696
        %v698 = vrot.slane %v220, %v697
        %v699 = vlaneseq
        %v700 = vshrl.u32 %v699, 7
        %v701 = vsub.s32 2, %v700
        %v702 = vrot.slane %v221, %v701
        %v703 = vlaneseq
        %v704 = vshrl.u32 %v703, 7
        %v705 = vsub.s32 2, %v704
        %v706 = vrot.slane %v222, %v705
        %v707 = vlaneseq
        %v708 = vshrl.u32 %v707, 7
        %v709 = vsub.s32 2, %v708
        %v710 = vrot.slane %v223, %v709
        %v711 = vlaneseq
        %v712 = vshrl.u32 %v711, 7
        %v713 = vsub.s32 2, %v712
        %v714 = vrot.slane %v224, %v713
        %v715 = vlaneseq
        %v716 = vshrl.u32 %v715, 7
        %v717 = vsub.s32 2, %v716
        %v718 = vrot.slane %v225, %v717
        %v719 = vmul.f32 %v589, %v594
        %v720 = vmul.f32 %v589, %v598
        %v721 = vmul.f32 %v589, %v602
        %v722 = vmul.f32 %v589, %v606
        %v723 = vmul.f32 %v589, %v610
        %v724 = vmul.f32 %v589, %v614
        %v725 = vmul.f32 %v589, %v618
        %v726 = vmul.f32 %v589, %v622
        %v727 = vmul.f32 %v589, %v626
        %v728 = vmul.f32 %v589, %v630
        %v729 = vmul.f32 %v589, %v634
        %v730 = vmul.f32 %v589, %v638
        %v731 = vmul.f32 %v589, %v642
        %v732 = vmul.f32 %v589, %v646
        %v733 = vmul.f32 %v589, %v650
        %v734 = vmul.f32 %v589, %v654
        %v735 = vmul.f32 %v589, %v658
        %v736 = vmul.f32 %v589, %v662
        %v737 = vmul.f32 %v589, %v666
        %v738 = vmul.f32 %v589, %v670
        %v739 = vmul.f32 %v589, %v674
        %v740 = vmul.f32 %v589, %v678
        %v741 = vmul.f32 %v589, %v682
        %v742 = vmul.f32 %v589, %v686
        %v743 = vmul.f32 %v589, %v690
        %v744 = vmul.f32 %v589, %v694
        %v745 = vmul.f32 %v589, %v698
        %v746 = vmul.f32 %v589, %v702
        %v747 = vmul.f32 %v589, %v706
        %v748 = vmul.f32 %v589, %v710
        %v749 = vmul.f32 %v589, %v714
        %v750 = vmul.f32 %v589, %v718
        %v751 = vadd.f32 %v555, %v719
        %v752 = vadd.f32 %v556, %v720
        %v753 = vadd.f32 %v557, %v721
        %v754 = vadd.f32 %v558, %v722
        %v755 = vadd.f32 %v559, %v723
        %v756 = vadd.f32 %v560, %v724
        %v757 = vadd.f32 %v561, %v725
        %v758 = vadd.f32 %v562, %v726
        %v759 = vadd.f32 %v563, %v727
        %v760 = vadd.f32 %v564, %v728
        %v761 = vadd.f32 %v565, %v729
        %v762 = vadd.f32 %v566, %v730
        %v763 = vadd.f32 %v567, %v731
        %v764 = vadd.f32 %v568, %v732
        %v765 = vadd.f32 %v569, %v733
        %v766 = vadd.f32 %v570, %v734
        %v767 = vadd.f32 %v571, %v735
        %v768 = vadd.f32 %v572, %v736
        %v769 = vadd.f32 %v573, %v737
        %v770 = vadd.f32 %v574, %v738
        %v771 = vadd.f32 %v575, %v739
        %v772 = vadd.f32 %v576, %v740
        %v773 = vadd.f32 %v577, %v741
        %v774 = vadd.f32 %v578, %v742
        %v775 = vadd.f32 %v579, %v743
        %v776 = vadd.f32 %v580, %v744
        %v777 = vadd.f32 %v581, %v745
        %v778 = vadd.f32 %v582, %v746
        %v779 = vadd.f32 %v583, %v747
        %v780 = vadd.f32 %v584, %v748
        %v781 = vadd.f32 %v585, %v749
        %v782 = vadd.f32 %v586, %v750
        %783 = vset.pattern.permute.xlu0 3
        %784 = vperm.xlu0 %783, %v193
        %v785 = vpop.permute.xlu0 %784
        %v787 = vlaneseq
        %v788 = vshrl.u32 %v787, 7
        %v789 = vsub.s32 3, %v788
        %v790 = vrot.slane %v194, %v789
        %v791 = vlaneseq
        %v792 = vshrl.u32 %v791, 7
        %v793 = vsub.s32 3, %v792
        %v794 = vrot.slane %v195, %v793
        %v795 = vlaneseq
        %v796 = vshrl.u32 %v795, 7
        %v797 = vsub.s32 3, %v796
        %v798 = vrot.slane %v196, %v797
        %v799 = vlaneseq
        %v800 = vshrl.u32 %v799, 7
        %v801 = vsub.s32 3, %v800
        %v802 = vrot.slane %v197, %v801
        %v803 = vlaneseq
        %v804 = vshrl.u32 %v803, 7
        %v805 = vsub.s32 3, %v804
        %v806 = vrot.slane %v198, %v805
        %v807 = vlaneseq
        %v808 = vshrl.u32 %v807, 7
        %v809 = vsub.s32 3, %v808
        %v810 = vrot.slane %v199, %v809
        %v811 = vlaneseq
        %v812 = vshrl.u32 %v811, 7
        %v813 = vsub.s32 3, %v812
        %v814 = vrot.slane %v200, %v813
        %v815 = vlaneseq
        %v816 = vshrl.u32 %v815, 7
        %v817 = vsub.s32 3, %v816
        %v818 = vrot.slane %v201, %v817
        %v819 = vlaneseq
        %v820 = vshrl.u32 %v819, 7
        %v821 = vsub.s32 3, %v820
        %v822 = vrot.slane %v202, %v821
        %v823 = vlaneseq
        %v824 = vshrl.u32 %v823, 7
        %v825 = vsub.s32 3, %v824
        %v826 = vrot.slane %v203, %v825
        %v827 = vlaneseq
        %v828 = vshrl.u32 %v827, 7
        %v829 = vsub.s32 3, %v828
        %v830 = vrot.slane %v204, %v829
        %v831 = vlaneseq
        %v832 = vshrl.u32 %v831, 7
        %v833 = vsub.s32 3, %v832
        %v834 = vrot.slane %v205, %v833
        %v835 = vlaneseq
        %v836 = vshrl.u32 %v835, 7
        %v837 = vsub.s32 3, %v836
        %v838 = vrot.slane %v206, %v837
        %v839 = vlaneseq
        %v840 = vshrl.u32 %v839, 7
        %v841 = vsub.s32 3, %v840
        %v842 = vrot.slane %v207, %v841
        %v843 = vlaneseq
        %v844 = vshrl.u32 %v843, 7
        %v845 = vsub.s32 3, %v844
        %v846 = vrot.slane %v208, %v845
        %v847 = vlaneseq
        %v848 = vshrl.u32 %v847, 7
        %v849 = vsub.s32 3, %v848
        %v850 = vrot.slane %v209, %v849
        %v851 = vlaneseq
        %v852 = vshrl.u32 %v851, 7
        %v853 = vsub.s32 3, %v852
        %v854 = vrot.slane %v210, %v853
        %v855 = vlaneseq
        %v856 = vshrl.u32 %v855, 7
        %v857 = vsub.s32 3, %v856
        %v858 = vrot.slane %v211, %v857
        %v859 = vlaneseq
        %v860 = vshrl.u32 %v859, 7
        %v861 = vsub.s32 3, %v860
        %v862 = vrot.slane %v212, %v861
        %v863 = vlaneseq
        %v864 = vshrl.u32 %v863, 7
        %v865 = vsub.s32 3, %v864
        %v866 = vrot.slane %v213, %v865
        %v867 = vlaneseq
        %v868 = vshrl.u32 %v867, 7
        %v869 = vsub.s32 3, %v868
        %v870 = vrot.slane %v214, %v869
        %v871 = vlaneseq
        %v872 = vshrl.u32 %v871, 7
        %v873 = vsub.s32 3, %v872
        %v874 = vrot.slane %v215, %v873
        %v875 = vlaneseq
        %v876 = vshrl.u32 %v875, 7
        %v877 = vsub.s32 3, %v876
        %v878 = vrot.slane %v216, %v877
        %v879 = vlaneseq
        %v880 = vshrl.u32 %v879, 7
        %v881 = vsub.s32 3, %v880
        %v882 = vrot.slane %v217, %v881
        %v883 = vlaneseq
        %v884 = vshrl.u32 %v883, 7
        %v885 = vsub.s32 3, %v884
        %v886 = vrot.slane %v218, %v885
        %v887 = vlaneseq
        %v888 = vshrl.u32 %v887, 7
        %v889 = vsub.s32 3, %v888
        %v890 = vrot.slane %v219, %v889
        %v891 = vlaneseq
        %v892 = vshrl.u32 %v891, 7
        %v893 = vsub.s32 3, %v892
        %v894 = vrot.slane %v220, %v893
        %v895 = vlaneseq
        %v896 = vshrl.u32 %v895, 7
        %v897 = vsub.s32 3, %v896
        %v898 = vrot.slane %v221, %v897
        %v899 = vlaneseq
        %v900 = vshrl.u32 %v899, 7
        %v901 = vsub.s32 3, %v900
        %v902 = vrot.slane %v222, %v901
        %v903 = vlaneseq
        %v904 = vshrl.u32 %v903, 7
        %v905 = vsub.s32 3, %v904
        %v906 = vrot.slane %v223, %v905
        %v907 = vlaneseq
        %v908 = vshrl.u32 %v907, 7
        %v909 = vsub.s32 3, %v908
        %v910 = vrot.slane %v224, %v909
        %v911 = vlaneseq
        %v912 = vshrl.u32 %v911, 7
        %v913 = vsub.s32 3, %v912
        %v914 = vrot.slane %v225, %v913
        %v915 = vmul.f32 %v785, %v790
        %v916 = vmul.f32 %v785, %v794
        %v917 = vmul.f32 %v785, %v798
        %v918 = vmul.f32 %v785, %v802
        %v919 = vmul.f32 %v785, %v806
        %v920 = vmul.f32 %v785, %v810
        %v921 = vmul.f32 %v785, %v814
        %v922 = vmul.f32 %v785, %v818
        %v923 = vmul.f32 %v785, %v822
        %v924 = vmul.f32 %v785, %v826
        %v925 = vmul.f32 %v785, %v830
        %v926 = vmul.f32 %v785, %v834
        %v927 = vmul.f32 %v785, %v838
        %v928 = vmul.f32 %v785, %v842
        %v929 = vmul.f32 %v785, %v846
        %v930 = vmul.f32 %v785, %v850
        %v931 = vmul.f32 %v785, %v854
        %v932 = vmul.f32 %v785, %v858
        %v933 = vmul.f32 %v785, %v862
        %v934 = vmul.f32 %v785, %v866
        %v935 = vmul.f32 %v785, %v870
        %v936 = vmul.f32 %v785, %v874
        %v937 = vmul.f32 %v785, %v878
        %v938 = vmul.f32 %v785, %v882
        %v939 = vmul.f32 %v785, %v886
        %v940 = vmul.f32 %v785, %v890
        %v941 = vmul.f32 %v785, %v894
        %v942 = vmul.f32 %v785, %v898
        %v943 = vmul.f32 %v785, %v902
        %v944 = vmul.f32 %v785, %v906
        %v945 = vmul.f32 %v785, %v910
        %v946 = vmul.f32 %v785, %v914
        %v947 = vadd.f32 %v751, %v915
        %v948 = vadd.f32 %v752, %v916
        %v949 = vadd.f32 %v753, %v917
        %v950 = vadd.f32 %v754, %v918
        %v951 = vadd.f32 %v755, %v919
        %v952 = vadd.f32 %v756, %v920
        %v953 = vadd.f32 %v757, %v921
        %v954 = vadd.f32 %v758, %v922
        %v955 = vadd.f32 %v759, %v923
        %v956 = vadd.f32 %v760, %v924
        %v957 = vadd.f32 %v761, %v925
        %v958 = vadd.f32 %v762, %v926
        %v959 = vadd.f32 %v763, %v927
        %v960 = vadd.f32 %v764, %v928
        %v961 = vadd.f32 %v765, %v929
        %v962 = vadd.f32 %v766, %v930
        %v963 = vadd.f32 %v767, %v931
        %v964 = vadd.f32 %v768, %v932
        %v965 = vadd.f32 %v769, %v933
        %v966 = vadd.f32 %v770, %v934
        %v967 = vadd.f32 %v771, %v935
        %v968 = vadd.f32 %v772, %v936
        %v969 = vadd.f32 %v773, %v937
        %v970 = vadd.f32 %v774, %v938
        %v971 = vadd.f32 %v775, %v939
        %v972 = vadd.f32 %v776, %v940
        %v973 = vadd.f32 %v777, %v941
        %v974 = vadd.f32 %v778, %v942
        %v975 = vadd.f32 %v779, %v943
        %v976 = vadd.f32 %v780, %v944
        %v977 = vadd.f32 %v781, %v945
        %v978 = vadd.f32 %v782, %v946
        %979 = vset.pattern.permute.xlu0 4
        %980 = vperm.xlu0 %979, %v193
        %v981 = vpop.permute.xlu0 %980
        %v983 = vlaneseq
        %v984 = vshrl.u32 %v983, 7
        %v985 = vsub.s32 4, %v984
        %v986 = vrot.slane %v194, %v985
        %v987 = vlaneseq
        %v988 = vshrl.u32 %v987, 7
        %v989 = vsub.s32 4, %v988
        %v990 = vrot.slane %v195, %v989
        %v991 = vlaneseq
        %v992 = vshrl.u32 %v991, 7
        %v993 = vsub.s32 4, %v992
        %v994 = vrot.slane %v196, %v993
        %v995 = vlaneseq
        %v996 = vshrl.u32 %v995, 7
        %v997 = vsub.s32 4, %v996
        %v998 = vrot.slane %v197, %v997
        %v999 = vlaneseq
        %v1000 = vshrl.u32 %v999, 7
        %v1001 = vsub.s32 4, %v1000
        %v1002 = vrot.slane %v198, %v1001
        %v1003 = vlaneseq
        %v1004 = vshrl.u32 %v1003, 7
        %v1005 = vsub.s32 4, %v1004
        %v1006 = vrot.slane %v199, %v1005
        %v1007 = vlaneseq
        %v1008 = vshrl.u32 %v1007, 7
        %v1009 = vsub.s32 4, %v1008
        %v1010 = vrot.slane %v200, %v1009
        %v1011 = vlaneseq
        %v1012 = vshrl.u32 %v1011, 7
        %v1013 = vsub.s32 4, %v1012
        %v1014 = vrot.slane %v201, %v1013
        %v1015 = vlaneseq
        %v1016 = vshrl.u32 %v1015, 7
        %v1017 = vsub.s32 4, %v1016
        %v1018 = vrot.slane %v202, %v1017
        %v1019 = vlaneseq
        %v1020 = vshrl.u32 %v1019, 7
        %v1021 = vsub.s32 4, %v1020
        %v1022 = vrot.slane %v203, %v1021
        %v1023 = vlaneseq
        %v1024 = vshrl.u32 %v1023, 7
        %v1025 = vsub.s32 4, %v1024
        %v1026 = vrot.slane %v204, %v1025
        %v1027 = vlaneseq
        %v1028 = vshrl.u32 %v1027, 7
        %v1029 = vsub.s32 4, %v1028
        %v1030 = vrot.slane %v205, %v1029
        %v1031 = vlaneseq
        %v1032 = vshrl.u32 %v1031, 7
        %v1033 = vsub.s32 4, %v1032
        %v1034 = vrot.slane %v206, %v1033
        %v1035 = vlaneseq
        %v1036 = vshrl.u32 %v1035, 7
        %v1037 = vsub.s32 4, %v1036
        %v1038 = vrot.slane %v207, %v1037
        %v1039 = vlaneseq
        %v1040 = vshrl.u32 %v1039, 7
        %v1041 = vsub.s32 4, %v1040
        %v1042 = vrot.slane %v208, %v1041
        %v1043 = vlaneseq
        %v1044 = vshrl.u32 %v1043, 7
        %v1045 = vsub.s32 4, %v1044
        %v1046 = vrot.slane %v209, %v1045
        %v1047 = vlaneseq
        %v1048 = vshrl.u32 %v1047, 7
        %v1049 = vsub.s32 4, %v1048
        %v1050 = vrot.slane %v210, %v1049
        %v1051 = vlaneseq
        %v1052 = vshrl.u32 %v1051, 7
        %v1053 = vsub.s32 4, %v1052
        %v1054 = vrot.slane %v211, %v1053
        %v1055 = vlaneseq
        %v1056 = vshrl.u32 %v1055, 7
        %v1057 = vsub.s32 4, %v1056
        %v1058 = vrot.slane %v212, %v1057
        %v1059 = vlaneseq
        %v1060 = vshrl.u32 %v1059, 7
        %v1061 = vsub.s32 4, %v1060
        %v1062 = vrot.slane %v213, %v1061
        %v1063 = vlaneseq
        %v1064 = vshrl.u32 %v1063, 7
        %v1065 = vsub.s32 4, %v1064
        %v1066 = vrot.slane %v214, %v1065
        %v1067 = vlaneseq
        %v1068 = vshrl.u32 %v1067, 7
        %v1069 = vsub.s32 4, %v1068
        %v1070 = vrot.slane %v215, %v1069
        %v1071 = vlaneseq
        %v1072 = vshrl.u32 %v1071, 7
        %v1073 = vsub.s32 4, %v1072
        %v1074 = vrot.slane %v216, %v1073
        %v1075 = vlaneseq
        %v1076 = vshrl.u32 %v1075, 7
        %v1077 = vsub.s32 4, %v1076
        %v1078 = vrot.slane %v217, %v1077
        %v1079 = vlaneseq
        %v1080 = vshrl.u32 %v1079, 7
        %v1081 = vsub.s32 4, %v1080
        %v1082 = vrot.slane %v218, %v1081
        %v1083 = vlaneseq
        %v1084 = vshrl.u32 %v1083, 7
        %v1085 = vsub.s32 4, %v1084
        %v1086 = vrot.slane %v219, %v1085
        %v1087 = vlaneseq
        %v1088 = vshrl.u32 %v1087, 7
        %v1089 = vsub.s32 4, %v1088
        %v1090 = vrot.slane %v220, %v1089
        %v1091 = vlaneseq
        %v1092 = vshrl.u32 %v1091, 7
        %v1093 = vsub.s32 4, %v1092
        %v1094 = vrot.slane %v221, %v1093
        %v1095 = vlaneseq
        %v1096 = vshrl.u32 %v1095, 7
        %v1097 = vsub.s32 4, %v1096
        %v1098 = vrot.slane %v222, %v1097
        %v1099 = vlaneseq
        %v1100 = vshrl.u32 %v1099, 7
        %v1101 = vsub.s32 4, %v1100
        %v1102 = vrot.slane %v223, %v1101
        %v1103 = vlaneseq
        %v1104 = vshrl.u32 %v1103, 7
        %v1105 = vsub.s32 4, %v1104
        %v1106 = vrot.slane %v224, %v1105
        %v1107 = vlaneseq
        %v1108 = vshrl.u32 %v1107, 7
        %v1109 = vsub.s32 4, %v1108
        %v1110 = vrot.slane %v225, %v1109
        %v1111 = vmul.f32 %v981, %v986
        %v1112 = vmul.f32 %v981, %v990
        %v1113 = vmul.f32 %v981, %v994
        %v1114 = vmul.f32 %v981, %v998
        %v1115 = vmul.f32 %v981, %v1002
        %v1116 = vmul.f32 %v981, %v1006
        %v1117 = vmul.f32 %v981, %v1010
        %v1118 = vmul.f32 %v981, %v1014
        %v1119 = vmul.f32 %v981, %v1018
        %v1120 = vmul.f32 %v981, %v1022
        %v1121 = vmul.f32 %v981, %v1026
        %v1122 = vmul.f32 %v981, %v1030
        %v1123 = vmul.f32 %v981, %v1034
        %v1124 = vmul.f32 %v981, %v1038
        %v1125 = vmul.f32 %v981, %v1042
        %v1126 = vmul.f32 %v981, %v1046
        %v1127 = vmul.f32 %v981, %v1050
        %v1128 = vmul.f32 %v981, %v1054
        %v1129 = vmul.f32 %v981, %v1058
        %v1130 = vmul.f32 %v981, %v1062
        %v1131 = vmul.f32 %v981, %v1066
        %v1132 = vmul.f32 %v981, %v1070
        %v1133 = vmul.f32 %v981, %v1074
        %v1134 = vmul.f32 %v981, %v1078
        %v1135 = vmul.f32 %v981, %v1082
        %v1136 = vmul.f32 %v981, %v1086
        %v1137 = vmul.f32 %v981, %v1090
        %v1138 = vmul.f32 %v981, %v1094
        %v1139 = vmul.f32 %v981, %v1098
        %v1140 = vmul.f32 %v981, %v1102
        %v1141 = vmul.f32 %v981, %v1106
        %v1142 = vmul.f32 %v981, %v1110
        %v1143 = vadd.f32 %v947, %v1111
        %v1144 = vadd.f32 %v948, %v1112
        %v1145 = vadd.f32 %v949, %v1113
        %v1146 = vadd.f32 %v950, %v1114
        %v1147 = vadd.f32 %v951, %v1115
        %v1148 = vadd.f32 %v952, %v1116
        %v1149 = vadd.f32 %v953, %v1117
        %v1150 = vadd.f32 %v954, %v1118
        %v1151 = vadd.f32 %v955, %v1119
        %v1152 = vadd.f32 %v956, %v1120
        %v1153 = vadd.f32 %v957, %v1121
        %v1154 = vadd.f32 %v958, %v1122
        %v1155 = vadd.f32 %v959, %v1123
        %v1156 = vadd.f32 %v960, %v1124
        %v1157 = vadd.f32 %v961, %v1125
        %v1158 = vadd.f32 %v962, %v1126
        %v1159 = vadd.f32 %v963, %v1127
        %v1160 = vadd.f32 %v964, %v1128
        %v1161 = vadd.f32 %v965, %v1129
        %v1162 = vadd.f32 %v966, %v1130
        %v1163 = vadd.f32 %v967, %v1131
        %v1164 = vadd.f32 %v968, %v1132
        %v1165 = vadd.f32 %v969, %v1133
        %v1166 = vadd.f32 %v970, %v1134
        %v1167 = vadd.f32 %v971, %v1135
        %v1168 = vadd.f32 %v972, %v1136
        %v1169 = vadd.f32 %v973, %v1137
        %v1170 = vadd.f32 %v974, %v1138
        %v1171 = vadd.f32 %v975, %v1139
        %v1172 = vadd.f32 %v976, %v1140
        %v1173 = vadd.f32 %v977, %v1141
        %v1174 = vadd.f32 %v978, %v1142
        %1175 = vset.pattern.permute.xlu0 5
        %1176 = vperm.xlu0 %1175, %v193
        %v1177 = vpop.permute.xlu0 %1176
        %v1179 = vlaneseq
        %v1180 = vshrl.u32 %v1179, 7
        %v1181 = vsub.s32 5, %v1180
        %v1182 = vrot.slane %v194, %v1181
        %v1183 = vlaneseq
        %v1184 = vshrl.u32 %v1183, 7
        %v1185 = vsub.s32 5, %v1184
        %v1186 = vrot.slane %v195, %v1185
        %v1187 = vlaneseq
        %v1188 = vshrl.u32 %v1187, 7
        %v1189 = vsub.s32 5, %v1188
        %v1190 = vrot.slane %v196, %v1189
        %v1191 = vlaneseq
        %v1192 = vshrl.u32 %v1191, 7
        %v1193 = vsub.s32 5, %v1192
        %v1194 = vrot.slane %v197, %v1193
        %v1195 = vlaneseq
        %v1196 = vshrl.u32 %v1195, 7
        %v1197 = vsub.s32 5, %v1196
        %v1198 = vrot.slane %v198, %v1197
        %v1199 = vlaneseq
        %v1200 = vshrl.u32 %v1199, 7
        %v1201 = vsub.s32 5, %v1200
        %v1202 = vrot.slane %v199, %v1201
        %v1203 = vlaneseq
        %v1204 = vshrl.u32 %v1203, 7
        %v1205 = vsub.s32 5, %v1204
        %v1206 = vrot.slane %v200, %v1205
        %v1207 = vlaneseq
        %v1208 = vshrl.u32 %v1207, 7
        %v1209 = vsub.s32 5, %v1208
        %v1210 = vrot.slane %v201, %v1209
        %v1211 = vlaneseq
        %v1212 = vshrl.u32 %v1211, 7
        %v1213 = vsub.s32 5, %v1212
        %v1214 = vrot.slane %v202, %v1213
        %v1215 = vlaneseq
        %v1216 = vshrl.u32 %v1215, 7
        %v1217 = vsub.s32 5, %v1216
        %v1218 = vrot.slane %v203, %v1217
        %v1219 = vlaneseq
        %v1220 = vshrl.u32 %v1219, 7
        %v1221 = vsub.s32 5, %v1220
        %v1222 = vrot.slane %v204, %v1221
        %v1223 = vlaneseq
        %v1224 = vshrl.u32 %v1223, 7
        %v1225 = vsub.s32 5, %v1224
        %v1226 = vrot.slane %v205, %v1225
        %v1227 = vlaneseq
        %v1228 = vshrl.u32 %v1227, 7
        %v1229 = vsub.s32 5, %v1228
        %v1230 = vrot.slane %v206, %v1229
        %v1231 = vlaneseq
        %v1232 = vshrl.u32 %v1231, 7
        %v1233 = vsub.s32 5, %v1232
        %v1234 = vrot.slane %v207, %v1233
        %v1235 = vlaneseq
        %v1236 = vshrl.u32 %v1235, 7
        %v1237 = vsub.s32 5, %v1236
        %v1238 = vrot.slane %v208, %v1237
        %v1239 = vlaneseq
        %v1240 = vshrl.u32 %v1239, 7
        %v1241 = vsub.s32 5, %v1240
        %v1242 = vrot.slane %v209, %v1241
        %v1243 = vlaneseq
        %v1244 = vshrl.u32 %v1243, 7
        %v1245 = vsub.s32 5, %v1244
        %v1246 = vrot.slane %v210, %v1245
        %v1247 = vlaneseq
        %v1248 = vshrl.u32 %v1247, 7
        %v1249 = vsub.s32 5, %v1248
        %v1250 = vrot.slane %v211, %v1249
        %v1251 = vlaneseq
        %v1252 = vshrl.u32 %v1251, 7
        %v1253 = vsub.s32 5, %v1252
        %v1254 = vrot.slane %v212, %v1253
        %v1255 = vlaneseq
        %v1256 = vshrl.u32 %v1255, 7
        %v1257 = vsub.s32 5, %v1256
        %v1258 = vrot.slane %v213, %v1257
        %v1259 = vlaneseq
        %v1260 = vshrl.u32 %v1259, 7
        %v1261 = vsub.s32 5, %v1260
        %v1262 = vrot.slane %v214, %v1261
        %v1263 = vlaneseq
        %v1264 = vshrl.u32 %v1263, 7
        %v1265 = vsub.s32 5, %v1264
        %v1266 = vrot.slane %v215, %v1265
        %v1267 = vlaneseq
        %v1268 = vshrl.u32 %v1267, 7
        %v1269 = vsub.s32 5, %v1268
        %v1270 = vrot.slane %v216, %v1269
        %v1271 = vlaneseq
        %v1272 = vshrl.u32 %v1271, 7
        %v1273 = vsub.s32 5, %v1272
        %v1274 = vrot.slane %v217, %v1273
        %v1275 = vlaneseq
        %v1276 = vshrl.u32 %v1275, 7
        %v1277 = vsub.s32 5, %v1276
        %v1278 = vrot.slane %v218, %v1277
        %v1279 = vlaneseq
        %v1280 = vshrl.u32 %v1279, 7
        %v1281 = vsub.s32 5, %v1280
        %v1282 = vrot.slane %v219, %v1281
        %v1283 = vlaneseq
        %v1284 = vshrl.u32 %v1283, 7
        %v1285 = vsub.s32 5, %v1284
        %v1286 = vrot.slane %v220, %v1285
        %v1287 = vlaneseq
        %v1288 = vshrl.u32 %v1287, 7
        %v1289 = vsub.s32 5, %v1288
        %v1290 = vrot.slane %v221, %v1289
        %v1291 = vlaneseq
        %v1292 = vshrl.u32 %v1291, 7
        %v1293 = vsub.s32 5, %v1292
        %v1294 = vrot.slane %v222, %v1293
        %v1295 = vlaneseq
        %v1296 = vshrl.u32 %v1295, 7
        %v1297 = vsub.s32 5, %v1296
        %v1298 = vrot.slane %v223, %v1297
        %v1299 = vlaneseq
        %v1300 = vshrl.u32 %v1299, 7
        %v1301 = vsub.s32 5, %v1300
        %v1302 = vrot.slane %v224, %v1301
        %v1303 = vlaneseq
        %v1304 = vshrl.u32 %v1303, 7
        %v1305 = vsub.s32 5, %v1304
        %v1306 = vrot.slane %v225, %v1305
        %v1307 = vmul.f32 %v1177, %v1182
        %v1308 = vmul.f32 %v1177, %v1186
        %v1309 = vmul.f32 %v1177, %v1190
        %v1310 = vmul.f32 %v1177, %v1194
        %v1311 = vmul.f32 %v1177, %v1198
        %v1312 = vmul.f32 %v1177, %v1202
        %v1313 = vmul.f32 %v1177, %v1206
        %v1314 = vmul.f32 %v1177, %v1210
        %v1315 = vmul.f32 %v1177, %v1214
        %v1316 = vmul.f32 %v1177, %v1218
        %v1317 = vmul.f32 %v1177, %v1222
        %v1318 = vmul.f32 %v1177, %v1226
        %v1319 = vmul.f32 %v1177, %v1230
        %v1320 = vmul.f32 %v1177, %v1234
        %v1321 = vmul.f32 %v1177, %v1238
        %v1322 = vmul.f32 %v1177, %v1242
        %v1323 = vmul.f32 %v1177, %v1246
        %v1324 = vmul.f32 %v1177, %v1250
        %v1325 = vmul.f32 %v1177, %v1254
        %v1326 = vmul.f32 %v1177, %v1258
        %v1327 = vmul.f32 %v1177, %v1262
        %v1328 = vmul.f32 %v1177, %v1266
        %v1329 = vmul.f32 %v1177, %v1270
        %v1330 = vmul.f32 %v1177, %v1274
        %v1331 = vmul.f32 %v1177, %v1278
        %v1332 = vmul.f32 %v1177, %v1282
        %v1333 = vmul.f32 %v1177, %v1286
        %v1334 = vmul.f32 %v1177, %v1290
        %v1335 = vmul.f32 %v1177, %v1294
        %v1336 = vmul.f32 %v1177, %v1298
        %v1337 = vmul.f32 %v1177, %v1302
        %v1338 = vmul.f32 %v1177, %v1306
        %v1339 = vadd.f32 %v1143, %v1307
        %v1340 = vadd.f32 %v1144, %v1308
        %v1341 = vadd.f32 %v1145, %v1309
        %v1342 = vadd.f32 %v1146, %v1310
        %v1343 = vadd.f32 %v1147, %v1311
        %v1344 = vadd.f32 %v1148, %v1312
        %v1345 = vadd.f32 %v1149, %v1313
        %v1346 = vadd.f32 %v1150, %v1314
        %v1347 = vadd.f32 %v1151, %v1315
        %v1348 = vadd.f32 %v1152, %v1316
        %v1349 = vadd.f32 %v1153, %v1317
        %v1350 = vadd.f32 %v1154, %v1318
        %v1351 = vadd.f32 %v1155, %v1319
        %v1352 = vadd.f32 %v1156, %v1320
        %v1353 = vadd.f32 %v1157, %v1321
        %v1354 = vadd.f32 %v1158, %v1322
        %v1355 = vadd.f32 %v1159, %v1323
        %v1356 = vadd.f32 %v1160, %v1324
        %v1357 = vadd.f32 %v1161, %v1325
        %v1358 = vadd.f32 %v1162, %v1326
        %v1359 = vadd.f32 %v1163, %v1327
        %v1360 = vadd.f32 %v1164, %v1328
        %v1361 = vadd.f32 %v1165, %v1329
        %v1362 = vadd.f32 %v1166, %v1330
        %v1363 = vadd.f32 %v1167, %v1331
        %v1364 = vadd.f32 %v1168, %v1332
        %v1365 = vadd.f32 %v1169, %v1333
        %v1366 = vadd.f32 %v1170, %v1334
        %v1367 = vadd.f32 %v1171, %v1335
        %v1368 = vadd.f32 %v1172, %v1336
        %v1369 = vadd.f32 %v1173, %v1337
        %v1370 = vadd.f32 %v1174, %v1338
        %1371 = vset.pattern.permute.xlu0 6
        %1372 = vperm.xlu0 %1371, %v193
        %v1373 = vpop.permute.xlu0 %1372
        %v1375 = vlaneseq
        %v1376 = vshrl.u32 %v1375, 7
        %v1377 = vsub.s32 6, %v1376
        %v1378 = vrot.slane %v194, %v1377
        %v1379 = vlaneseq
        %v1380 = vshrl.u32 %v1379, 7
        %v1381 = vsub.s32 6, %v1380
        %v1382 = vrot.slane %v195, %v1381
        %v1383 = vlaneseq
        %v1384 = vshrl.u32 %v1383, 7
        %v1385 = vsub.s32 6, %v1384
        %v1386 = vrot.slane %v196, %v1385
        %v1387 = vlaneseq
        %v1388 = vshrl.u32 %v1387, 7
        %v1389 = vsub.s32 6, %v1388
        %v1390 = vrot.slane %v197, %v1389
        %v1391 = vlaneseq
        %v1392 = vshrl.u32 %v1391, 7
        %v1393 = vsub.s32 6, %v1392
        %v1394 = vrot.slane %v198, %v1393
        %v1395 = vlaneseq
        %v1396 = vshrl.u32 %v1395, 7
        %v1397 = vsub.s32 6, %v1396
        %v1398 = vrot.slane %v199, %v1397
        %v1399 = vlaneseq
        %v1400 = vshrl.u32 %v1399, 7
        %v1401 = vsub.s32 6, %v1400
        %v1402 = vrot.slane %v200, %v1401
        %v1403 = vlaneseq
        %v1404 = vshrl.u32 %v1403, 7
        %v1405 = vsub.s32 6, %v1404
        %v1406 = vrot.slane %v201, %v1405
        %v1407 = vlaneseq
        %v1408 = vshrl.u32 %v1407, 7
        %v1409 = vsub.s32 6, %v1408
        %v1410 = vrot.slane %v202, %v1409
        %v1411 = vlaneseq
        %v1412 = vshrl.u32 %v1411, 7
        %v1413 = vsub.s32 6, %v1412
        %v1414 = vrot.slane %v203, %v1413
        %v1415 = vlaneseq
        %v1416 = vshrl.u32 %v1415, 7
        %v1417 = vsub.s32 6, %v1416
        %v1418 = vrot.slane %v204, %v1417
        %v1419 = vlaneseq
        %v1420 = vshrl.u32 %v1419, 7
        %v1421 = vsub.s32 6, %v1420
        %v1422 = vrot.slane %v205, %v1421
        %v1423 = vlaneseq
        %v1424 = vshrl.u32 %v1423, 7
        %v1425 = vsub.s32 6, %v1424
        %v1426 = vrot.slane %v206, %v1425
        %v1427 = vlaneseq
        %v1428 = vshrl.u32 %v1427, 7
        %v1429 = vsub.s32 6, %v1428
        %v1430 = vrot.slane %v207, %v1429
        %v1431 = vlaneseq
        %v1432 = vshrl.u32 %v1431, 7
        %v1433 = vsub.s32 6, %v1432
        %v1434 = vrot.slane %v208, %v1433
        %v1435 = vlaneseq
        %v1436 = vshrl.u32 %v1435, 7
        %v1437 = vsub.s32 6, %v1436
        %v1438 = vrot.slane %v209, %v1437
        %v1439 = vlaneseq
        %v1440 = vshrl.u32 %v1439, 7
        %v1441 = vsub.s32 6, %v1440
        %v1442 = vrot.slane %v210, %v1441
        %v1443 = vlaneseq
        %v1444 = vshrl.u32 %v1443, 7
        %v1445 = vsub.s32 6, %v1444
        %v1446 = vrot.slane %v211, %v1445
        %v1447 = vlaneseq
        %v1448 = vshrl.u32 %v1447, 7
        %v1449 = vsub.s32 6, %v1448
        %v1450 = vrot.slane %v212, %v1449
        %v1451 = vlaneseq
        %v1452 = vshrl.u32 %v1451, 7
        %v1453 = vsub.s32 6, %v1452
        %v1454 = vrot.slane %v213, %v1453
        %v1455 = vlaneseq
        %v1456 = vshrl.u32 %v1455, 7
        %v1457 = vsub.s32 6, %v1456
        %v1458 = vrot.slane %v214, %v1457
        %v1459 = vlaneseq
        %v1460 = vshrl.u32 %v1459, 7
        %v1461 = vsub.s32 6, %v1460
        %v1462 = vrot.slane %v215, %v1461
        %v1463 = vlaneseq
        %v1464 = vshrl.u32 %v1463, 7
        %v1465 = vsub.s32 6, %v1464
        %v1466 = vrot.slane %v216, %v1465
        %v1467 = vlaneseq
        %v1468 = vshrl.u32 %v1467, 7
        %v1469 = vsub.s32 6, %v1468
        %v1470 = vrot.slane %v217, %v1469
        %v1471 = vlaneseq
        %v1472 = vshrl.u32 %v1471, 7
        %v1473 = vsub.s32 6, %v1472
        %v1474 = vrot.slane %v218, %v1473
        %v1475 = vlaneseq
        %v1476 = vshrl.u32 %v1475, 7
        %v1477 = vsub.s32 6, %v1476
        %v1478 = vrot.slane %v219, %v1477
        %v1479 = vlaneseq
        %v1480 = vshrl.u32 %v1479, 7
        %v1481 = vsub.s32 6, %v1480
        %v1482 = vrot.slane %v220, %v1481
        %v1483 = vlaneseq
        %v1484 = vshrl.u32 %v1483, 7
        %v1485 = vsub.s32 6, %v1484
        %v1486 = vrot.slane %v221, %v1485
        %v1487 = vlaneseq
        %v1488 = vshrl.u32 %v1487, 7
        %v1489 = vsub.s32 6, %v1488
        %v1490 = vrot.slane %v222, %v1489
        %v1491 = vlaneseq
        %v1492 = vshrl.u32 %v1491, 7
        %v1493 = vsub.s32 6, %v1492
        %v1494 = vrot.slane %v223, %v1493
        %v1495 = vlaneseq
        %v1496 = vshrl.u32 %v1495, 7
        %v1497 = vsub.s32 6, %v1496
        %v1498 = vrot.slane %v224, %v1497
        %v1499 = vlaneseq
        %v1500 = vshrl.u32 %v1499, 7
        %v1501 = vsub.s32 6, %v1500
        %v1502 = vrot.slane %v225, %v1501
        %v1503 = vmul.f32 %v1373, %v1378
        %v1504 = vmul.f32 %v1373, %v1382
        %v1505 = vmul.f32 %v1373, %v1386
        %v1506 = vmul.f32 %v1373, %v1390
        %v1507 = vmul.f32 %v1373, %v1394
        %v1508 = vmul.f32 %v1373, %v1398
        %v1509 = vmul.f32 %v1373, %v1402
        %v1510 = vmul.f32 %v1373, %v1406
        %v1511 = vmul.f32 %v1373, %v1410
        %v1512 = vmul.f32 %v1373, %v1414
        %v1513 = vmul.f32 %v1373, %v1418
        %v1514 = vmul.f32 %v1373, %v1422
        %v1515 = vmul.f32 %v1373, %v1426
        %v1516 = vmul.f32 %v1373, %v1430
        %v1517 = vmul.f32 %v1373, %v1434
        %v1518 = vmul.f32 %v1373, %v1438
        %v1519 = vmul.f32 %v1373, %v1442
        %v1520 = vmul.f32 %v1373, %v1446
        %v1521 = vmul.f32 %v1373, %v1450
        %v1522 = vmul.f32 %v1373, %v1454
        %v1523 = vmul.f32 %v1373, %v1458
        %v1524 = vmul.f32 %v1373, %v1462
        %v1525 = vmul.f32 %v1373, %v1466
        %v1526 = vmul.f32 %v1373, %v1470
        %v1527 = vmul.f32 %v1373, %v1474
        %v1528 = vmul.f32 %v1373, %v1478
        %v1529 = vmul.f32 %v1373, %v1482
        %v1530 = vmul.f32 %v1373, %v1486
        %v1531 = vmul.f32 %v1373, %v1490
        %v1532 = vmul.f32 %v1373, %v1494
        %v1533 = vmul.f32 %v1373, %v1498
        %v1534 = vmul.f32 %v1373, %v1502
        %v1535 = vadd.f32 %v1339, %v1503
        %v1536 = vadd.f32 %v1340, %v1504
        %v1537 = vadd.f32 %v1341, %v1505
        %v1538 = vadd.f32 %v1342, %v1506
        %v1539 = vadd.f32 %v1343, %v1507
        %v1540 = vadd.f32 %v1344, %v1508
        %v1541 = vadd.f32 %v1345, %v1509
        %v1542 = vadd.f32 %v1346, %v1510
        %v1543 = vadd.f32 %v1347, %v1511
        %v1544 = vadd.f32 %v1348, %v1512
        %v1545 = vadd.f32 %v1349, %v1513
        %v1546 = vadd.f32 %v1350, %v1514
        %v1547 = vadd.f32 %v1351, %v1515
        %v1548 = vadd.f32 %v1352, %v1516
        %v1549 = vadd.f32 %v1353, %v1517
        %v1550 = vadd.f32 %v1354, %v1518
        %v1551 = vadd.f32 %v1355, %v1519
        %v1552 = vadd.f32 %v1356, %v1520
        %v1553 = vadd.f32 %v1357, %v1521
        %v1554 = vadd.f32 %v1358, %v1522
        %v1555 = vadd.f32 %v1359, %v1523
        %v1556 = vadd.f32 %v1360, %v1524
        %v1557 = vadd.f32 %v1361, %v1525
        %v1558 = vadd.f32 %v1362, %v1526
        %v1559 = vadd.f32 %v1363, %v1527
        %v1560 = vadd.f32 %v1364, %v1528
        %v1561 = vadd.f32 %v1365, %v1529
        %v1562 = vadd.f32 %v1366, %v1530
        %v1563 = vadd.f32 %v1367, %v1531
        %v1564 = vadd.f32 %v1368, %v1532
        %v1565 = vadd.f32 %v1369, %v1533
        %v1566 = vadd.f32 %v1370, %v1534
        %1567 = vset.pattern.permute.xlu0 7
        %1568 = vperm.xlu0 %1567, %v193
        %v1569 = vpop.permute.xlu0 %1568
        %v1571 = vlaneseq
        %v1572 = vshrl.u32 %v1571, 7
        %v1573 = vsub.s32 7, %v1572
        %v1574 = vrot.slane %v194, %v1573
        %v1575 = vlaneseq
        %v1576 = vshrl.u32 %v1575, 7
        %v1577 = vsub.s32 7, %v1576
        %v1578 = vrot.slane %v195, %v1577
        %v1579 = vlaneseq
        %v1580 = vshrl.u32 %v1579, 7
        %v1581 = vsub.s32 7, %v1580
        %v1582 = vrot.slane %v196, %v1581
        %v1583 = vlaneseq
        %v1584 = vshrl.u32 %v1583, 7
        %v1585 = vsub.s32 7, %v1584
        %v1586 = vrot.slane %v197, %v1585
        %v1587 = vlaneseq
        %v1588 = vshrl.u32 %v1587, 7
        %v1589 = vsub.s32 7, %v1588
        %v1590 = vrot.slane %v198, %v1589
        %v1591 = vlaneseq
        %v1592 = vshrl.u32 %v1591, 7
        %v1593 = vsub.s32 7, %v1592
        %v1594 = vrot.slane %v199, %v1593
        %v1595 = vlaneseq
        %v1596 = vshrl.u32 %v1595, 7
        %v1597 = vsub.s32 7, %v1596
        %v1598 = vrot.slane %v200, %v1597
        %v1599 = vlaneseq
        %v1600 = vshrl.u32 %v1599, 7
        %v1601 = vsub.s32 7, %v1600
        %v1602 = vrot.slane %v201, %v1601
        %v1603 = vlaneseq
        %v1604 = vshrl.u32 %v1603, 7
        %v1605 = vsub.s32 7, %v1604
        %v1606 = vrot.slane %v202, %v1605
        %v1607 = vlaneseq
        %v1608 = vshrl.u32 %v1607, 7
        %v1609 = vsub.s32 7, %v1608
        %v1610 = vrot.slane %v203, %v1609
        %v1611 = vlaneseq
        %v1612 = vshrl.u32 %v1611, 7
        %v1613 = vsub.s32 7, %v1612
        %v1614 = vrot.slane %v204, %v1613
        %v1615 = vlaneseq
        %v1616 = vshrl.u32 %v1615, 7
        %v1617 = vsub.s32 7, %v1616
        %v1618 = vrot.slane %v205, %v1617
        %v1619 = vlaneseq
        %v1620 = vshrl.u32 %v1619, 7
        %v1621 = vsub.s32 7, %v1620
        %v1622 = vrot.slane %v206, %v1621
        %v1623 = vlaneseq
        %v1624 = vshrl.u32 %v1623, 7
        %v1625 = vsub.s32 7, %v1624
        %v1626 = vrot.slane %v207, %v1625
        %v1627 = vlaneseq
        %v1628 = vshrl.u32 %v1627, 7
        %v1629 = vsub.s32 7, %v1628
        %v1630 = vrot.slane %v208, %v1629
        %v1631 = vlaneseq
        %v1632 = vshrl.u32 %v1631, 7
        %v1633 = vsub.s32 7, %v1632
        %v1634 = vrot.slane %v209, %v1633
        %v1635 = vlaneseq
        %v1636 = vshrl.u32 %v1635, 7
        %v1637 = vsub.s32 7, %v1636
        %v1638 = vrot.slane %v210, %v1637
        %v1639 = vlaneseq
        %v1640 = vshrl.u32 %v1639, 7
        %v1641 = vsub.s32 7, %v1640
        %v1642 = vrot.slane %v211, %v1641
        %v1643 = vlaneseq
        %v1644 = vshrl.u32 %v1643, 7
        %v1645 = vsub.s32 7, %v1644
        %v1646 = vrot.slane %v212, %v1645
        %v1647 = vlaneseq
        %v1648 = vshrl.u32 %v1647, 7
        %v1649 = vsub.s32 7, %v1648
        %v1650 = vrot.slane %v213, %v1649
        %v1651 = vlaneseq
        %v1652 = vshrl.u32 %v1651, 7
        %v1653 = vsub.s32 7, %v1652
        %v1654 = vrot.slane %v214, %v1653
        %v1655 = vlaneseq
        %v1656 = vshrl.u32 %v1655, 7
        %v1657 = vsub.s32 7, %v1656
        %v1658 = vrot.slane %v215, %v1657
        %v1659 = vlaneseq
        %v1660 = vshrl.u32 %v1659, 7
        %v1661 = vsub.s32 7, %v1660
        %v1662 = vrot.slane %v216, %v1661
        %v1663 = vlaneseq
        %v1664 = vshrl.u32 %v1663, 7
        %v1665 = vsub.s32 7, %v1664
        %v1666 = vrot.slane %v217, %v1665
        %v1667 = vlaneseq
        %v1668 = vshrl.u32 %v1667, 7
        %v1669 = vsub.s32 7, %v1668
        %v1670 = vrot.slane %v218, %v1669
        %v1671 = vlaneseq
        %v1672 = vshrl.u32 %v1671, 7
        %v1673 = vsub.s32 7, %v1672
        %v1674 = vrot.slane %v219, %v1673
        %v1675 = vlaneseq
        %v1676 = vshrl.u32 %v1675, 7
        %v1677 = vsub.s32 7, %v1676
        %v1678 = vrot.slane %v220, %v1677
        %v1679 = vlaneseq
        %v1680 = vshrl.u32 %v1679, 7
        %v1681 = vsub.s32 7, %v1680
        %v1682 = vrot.slane %v221, %v1681
        %v1683 = vlaneseq
        %v1684 = vshrl.u32 %v1683, 7
        %v1685 = vsub.s32 7, %v1684
        %v1686 = vrot.slane %v222, %v1685
        %v1687 = vlaneseq
        %v1688 = vshrl.u32 %v1687, 7
        %v1689 = vsub.s32 7, %v1688
        %v1690 = vrot.slane %v223, %v1689
        %v1691 = vlaneseq
        %v1692 = vshrl.u32 %v1691, 7
        %v1693 = vsub.s32 7, %v1692
        %v1694 = vrot.slane %v224, %v1693
        %v1695 = vlaneseq
        %v1696 = vshrl.u32 %v1695, 7
        %v1697 = vsub.s32 7, %v1696
        %v1698 = vrot.slane %v225, %v1697
        %v1699 = vmul.f32 %v1569, %v1574
        %v1700 = vmul.f32 %v1569, %v1578
        %v1701 = vmul.f32 %v1569, %v1582
        %v1702 = vmul.f32 %v1569, %v1586
        %v1703 = vmul.f32 %v1569, %v1590
        %v1704 = vmul.f32 %v1569, %v1594
        %v1705 = vmul.f32 %v1569, %v1598
        %v1706 = vmul.f32 %v1569, %v1602
        %v1707 = vmul.f32 %v1569, %v1606
        %v1708 = vmul.f32 %v1569, %v1610
        %v1709 = vmul.f32 %v1569, %v1614
        %v1710 = vmul.f32 %v1569, %v1618
        %v1711 = vmul.f32 %v1569, %v1622
        %v1712 = vmul.f32 %v1569, %v1626
        %v1713 = vmul.f32 %v1569, %v1630
        %v1714 = vmul.f32 %v1569, %v1634
        %v1715 = vmul.f32 %v1569, %v1638
        %v1716 = vmul.f32 %v1569, %v1642
        %v1717 = vmul.f32 %v1569, %v1646
        %v1718 = vmul.f32 %v1569, %v1650
        %v1719 = vmul.f32 %v1569, %v1654
        %v1720 = vmul.f32 %v1569, %v1658
        %v1721 = vmul.f32 %v1569, %v1662
        %v1722 = vmul.f32 %v1569, %v1666
        %v1723 = vmul.f32 %v1569, %v1670
        %v1724 = vmul.f32 %v1569, %v1674
        %v1725 = vmul.f32 %v1569, %v1678
        %v1726 = vmul.f32 %v1569, %v1682
        %v1727 = vmul.f32 %v1569, %v1686
        %v1728 = vmul.f32 %v1569, %v1690
        %v1729 = vmul.f32 %v1569, %v1694
        %v1730 = vmul.f32 %v1569, %v1698
        %v1731 = vadd.f32 %v1535, %v1699
        %v1732 = vadd.f32 %v1536, %v1700
        %v1733 = vadd.f32 %v1537, %v1701
        %v1734 = vadd.f32 %v1538, %v1702
        %v1735 = vadd.f32 %v1539, %v1703
        %v1736 = vadd.f32 %v1540, %v1704
        %v1737 = vadd.f32 %v1541, %v1705
        %v1738 = vadd.f32 %v1542, %v1706
        %v1739 = vadd.f32 %v1543, %v1707
        %v1740 = vadd.f32 %v1544, %v1708
        %v1741 = vadd.f32 %v1545, %v1709
        %v1742 = vadd.f32 %v1546, %v1710
        %v1743 = vadd.f32 %v1547, %v1711
        %v1744 = vadd.f32 %v1548, %v1712
        %v1745 = vadd.f32 %v1549, %v1713
        %v1746 = vadd.f32 %v1550, %v1714
        %v1747 = vadd.f32 %v1551, %v1715
        %v1748 = vadd.f32 %v1552, %v1716
        %v1749 = vadd.f32 %v1553, %v1717
        %v1750 = vadd.f32 %v1554, %v1718
        %v1751 = vadd.f32 %v1555, %v1719
        %v1752 = vadd.f32 %v1556, %v1720
        %v1753 = vadd.f32 %v1557, %v1721
        %v1754 = vadd.f32 %v1558, %v1722
        %v1755 = vadd.f32 %v1559, %v1723
        %v1756 = vadd.f32 %v1560, %v1724
        %v1757 = vadd.f32 %v1561, %v1725
        %v1758 = vadd.f32 %v1562, %v1726
        %v1759 = vadd.f32 %v1563, %v1727
        %v1760 = vadd.f32 %v1564, %v1728
        %v1761 = vadd.f32 %v1565, %v1729
        %v1762 = vadd.f32 %v1566, %v1730
        %v1795 = vcombine.low %v1731, %v1732
        %v1796 = vcombine.low %v1733, %v1734
        %v1797 = vcombine.low %v1735, %v1736
        %v1798 = vcombine.low %v1737, %v1738
        %v1799 = vcombine.low %v1739, %v1740
        %v1800 = vcombine.low %v1741, %v1742
        %v1801 = vcombine.low %v1743, %v1744
        %v1802 = vcombine.low %v1745, %v1746
        %v1803 = vcombine.low %v1747, %v1748
        %v1804 = vcombine.low %v1749, %v1750
        %v1805 = vcombine.low %v1751, %v1752
        %v1806 = vcombine.low %v1753, %v1754
        %v1807 = vcombine.low %v1755, %v1756
        %v1808 = vcombine.low %v1757, %v1758
        %v1809 = vcombine.low %v1759, %v1760
        %v1810 = vcombine.low %v1761, %v1762
        %1827 = vst [vmem:[%s190] sm:$0xff] %v1795
        %1828 = vst [vmem:[%s190 + $0x8] sm:$0xff] %v1796
        %1829 = vst [vmem:[%s190 + $0x10] sm:$0xff] %v1797
        %1830 = vst [vmem:[%s190 + $0x18] sm:$0xff] %v1798
        %1831 = vst [vmem:[%s190 + $0x20] sm:$0xff] %v1799
        %1832 = vst [vmem:[%s190 + $0x28] sm:$0xff] %v1800
        %1833 = vst [vmem:[%s190 + $0x30] sm:$0xff] %v1801
        %1834 = vst [vmem:[%s190 + $0x38] sm:$0xff] %v1802
        %1835 = vst [vmem:[%s190 + $0x40] sm:$0xff] %v1803
        %1836 = vst [vmem:[%s190 + $0x48] sm:$0xff] %v1804
        %1837 = vst [vmem:[%s190 + $0x50] sm:$0xff] %v1805
        %1838 = vst [vmem:[%s190 + $0x58] sm:$0xff] %v1806
        %1839 = vst [vmem:[%s190 + $0x60] sm:$0xff] %v1807
        %1840 = vst [vmem:[%s190 + $0x68] sm:$0xff] %v1808
        %1841 = vst [vmem:[%s190 + $0x70] sm:$0xff] %v1809
        %1842 = vst [vmem:[%s190 + $0x78] sm:$0xff] %v1810
        %s1843 = sand.u32 %s91, 1
        %s1844 = scalar_lea.sflag [#allocation4], %s1843
        %s1845 = sand.u32 %s91, 1
        %s1846 = smul.addr %s1845, 128
        %s1847 = scalar_lea.vmem [#allocation7], %s1846
        // Predicated region
        $region37: #{tpu_custom_call.1} parent=27 // pred_check
          %p1848 = pneg %p101
        $region38: #{tpu_custom_call.1} parent=27 // pred_check_branch
          %1850 = sbr.rel (%p1848) target = $region40
        $region39: #{tpu_custom_call.1} parent=27 // pred_region
          %s1851 = smul.u32 32, %s25
          %s1853 = ssub.s32 2048, 2048
          %1854 = vsyncadd %s1844, %s1853
          %s1855 = smul.addr %s24, 32
          %s1856 = sadd.s32 %s1851, %s1855
          %s1857 = smul.addr %s1856, 64
          %s1858 = scalar_lea.hbm %s2, %s1857
          %s1860 = sshll.u32 %s1847, 4
          %s1861 = int_to_ptr.vmem [resolvable:$true] %s1860
          %1863 = dma.vmem_to_hbm [thread:$0]  %s1861, 2048, %s1858, %s1844
        $region40: #{tpu_custom_call.1} parent=27 // pred_fallthru
          _
      $region28: #{tpu_custom_call.1} parent=5 // pred_fallthru
        _
      %p1864 = scmp.le.s32.totalorder 2, %s15
      // Predicated region
      $region41: #{tpu_custom_call.1} parent=5 // pred_check
        %p1865 = pneg %p1864
      $region42: #{tpu_custom_call.1} parent=5 // pred_check_branch
        %1867 = sbr.rel (%p1865) target = $region44
      $region43: #{tpu_custom_call.1} parent=5 // pred_region
        %s1868 = ssub.s32 %s15, 2
        // Predicated region
        $region45: #{tpu_custom_call.1} parent=43 // pred_check
          %p1869 = pneg %p107
        $region46: #{tpu_custom_call.1} parent=43 // pred_check_branch
          %1871 = sbr.rel (%p1869) target = $region48
        $region47: #{tpu_custom_call.1} parent=43 // pred_region
          %s1872 = sand.u32 %s92, 1
          %s1873 = scalar_lea.sflag [#allocation4], %s1872
          %s1874 = sand.u32 %s92, 1
          %s1875 = smul.addr %s1874, 128
          %s1876 = scalar_lea.vmem [#allocation7], %s1875
          %1877 = dma.done %s1873, 2048
        $region48: #{tpu_custom_call.1} parent=43 // pred_fallthru
          _
      $region44: #{tpu_custom_call.1} parent=5 // pred_fallthru
        _
    $region6: #{tpu_custom_call.1} parent=1 // loop_footer
      %s19 = sadd.s32 1, %s15
    $region7: #{tpu_custom_call.1} parent=1 // loop_footer_branch
      %14 = sbr.rel target = $region3
    $region8: #{tpu_custom_call.1} parent=1 // loop_exit
      _
    %1878 = vsyncpa [#allocation3], 1
    %s1879 = scalar_lea.sflag [#allocation3], 1
    %1880 = vsyncpa %s1879, 1
    %1881 = vsyncpa [#allocation6], 1
    %1882 = vsyncpa [#allocation4], 1
    %s1883 = scalar_lea.sflag [#allocation4], 1
    %1884 = vsyncpa %s1883, 1

</llo_original>
